<compile_context>
chip_gen: v5e
topology: v5e:2x2
jax: 0.10.0
libtpu: 0.0.40
codegen_flags: <defaults>
</compile_context>

<pallas_src>
import functools

import jax
import jax.numpy as jnp
import numpy as np
from jax import lax
from jax.experimental import pallas as pl
from jax.experimental.pallas import tpu as pltpu


# Inner lane sub-chunk: bounds the live vreg set to roughly
# (2*Cin + 3) slabs of (H, chunk) f32  (~24 vregs for Cin=4, H=16) << 64.
_LANE_CHUNK = 128


# ----------------------------------------------------------------------------
# Pallas kernel: whole TCM layer for one lane tile (Cin, H, T).
# ----------------------------------------------------------------------------
def _tcm_kernel(x_ref, w1_ref, s1_ref, t1_ref, wdw_ref, s2_ref, t2_ref, w2_ref,
                *out_refs, K, rate, Cin, Cmid, H, chunk, with_features):
    out_ref = out_refs[0]
    feat_ref = out_refs[1] if with_features else None
    T = x_ref.shape[-1]

    shifts = [(K - 1 - k) * rate for k in range(K - 1)]   # causal shifts, k=0..K-2

    def do_cols(cols, width):
        # Sublane index for masking the causal pad rows of the rolled slabs.
        row = lax.broadcasted_iota(jnp.int32, (H, width), 0)
        masks = [row >= s for s in shifts]

        # Inputs loaded once per chunk; residual accumulators live in vregs and
        # each output channel is stored exactly once at the end.
        xs = [x_ref[c, :, cols] for c in range(Cin)]
        out_acc = list(xs)                                  # out starts at x

        for m in range(Cmid):
            # conv_first (1x1) + folded BN1 + ReLU — VPU scalar*vector MACs
            # (Cin is far too small for the MXU); weights read from SMEM.
            acc = xs[0] * w1_ref[m, 0]
            for c in range(1, Cin):
                acc = acc + xs[c] * w1_ref[m, c]
            acc = jnp.maximum(acc * s1_ref[m] + t1_ref[m], 0.0)
            if with_features:
                feat_ref[m, :, cols] = acc.astype(feat_ref.dtype)

            # Causal dilated depthwise conv, fused & register-resident:
            #   y[h] = sum_k wdw[k] * h1[h - (K-1-k)*rate]   (zero for h < shift)
            # Shift via pltpu.roll on the sublane axis (XLU) + iota mask (VPU);
            # no VMEM round trip through a padded scratch.
            y = acc * wdw_ref[K - 1, m]
            for k in range(K - 1):
                s = shifts[k]
                if s >= H:
                    continue                                # fully in the zero pad
                sh = pltpu.roll(acc, shift=s, axis=0)
                y = y + jnp.where(masks[k], sh, 0.0) * wdw_ref[k, m]
            y = jnp.maximum(y * s2_ref[m] + t2_ref[m], 0.0)  # folded BN2 + ReLU

            # conv_second (1x1) accumulated into the residual accumulators.
            for c in range(Cin):
                out_acc[c] = out_acc[c] + y * w2_ref[c, m]

        for c in range(Cin):
            out_ref[c, :, cols] = out_acc[c].astype(out_ref.dtype)

    if T <= chunk or T % chunk != 0:
        # Single straight-line pass (tiny / ragged tiles).  Ragged tiles much
        # larger than `chunk` may spill; acceptable for odd-sized inputs.
        do_cols(slice(None), T)
    else:
        nchunks = T // chunk

        def body(i, carry):
            start = pl.multiple_of(i * chunk, chunk)
            do_cols(pl.ds(start, chunk), chunk)
            return carry

        lax.fori_loop(0, nchunks, body, 0, unroll=True)


# ----------------------------------------------------------------------------
# VMEM budgeting & lane-tile selection.
# ----------------------------------------------------------------------------
def _vmem_caps():
    cap = 64 << 20                     # conservative default (v7x per-TC VMEM)
    try:
        cap = int(pltpu.get_tpu_info().vmem_capacity_bytes)
    except Exception:
        pass
    # Stay <= ~40 MiB of buffered tiles so double-buffered I/O + temporaries
    # always fit v7x's 64 MiB/TC; v5e/v6e (128 MiB) still get large tiles.
    budget = min(int(cap * 0.45), 40 << 20)
    return cap, budget


def _bytes_per_col(Cin, Cmid, H, out_itemsize, with_features):
    b = 2 * Cin * H * 4                     # x blocks (double-buffered)
    b += 2 * Cin * H * out_itemsize         # out blocks
    if with_features:
        b += 2 * Cmid * H * out_itemsize    # feat blocks
    return int(b * 1.25) + 64               # headroom for compiler temporaries


def _pick_col_tile(n, bytes_per_col, budget_bytes, parallel_factor=1):
    """Largest 128-multiple tile dividing n that fits the budget, preferring an
    EVEN total number of parallel grid steps (v7x shards across 2 TCs)."""
    if n % 128 != 0:
        return n                    # tiny / ragged input: one full (masked) tile
    cap = (budget_bytes // max(bytes_per_col, 1)) // 128 * 128
    cap = max(128, min(n, cap))     # never below one 128-lane tile; the VMEM
    best = best_multi = best_even = 0   # limit below is tied to the footprint.
    t = 128
    while t <= cap:
        if n % t == 0:
            steps = (n // t) * parallel_factor
            best = t
            if steps >= 2:
                best_multi = t
                if steps % 2 == 0:
                    best_even = t
        t += 128
    if best_even:
        return best_even
    if best_multi:
        return best_multi
    return best if best else n


def _vmem_limit(cap, footprint):
    return int(min(cap * 3 // 4, max(32 << 20, 2 * footprint + (4 << 20))))


# ----------------------------------------------------------------------------
# Core entry point on the lane-dense (Cin, H, N) layout (N = flattened B*W).
# ----------------------------------------------------------------------------
def tcm_layer_chn(x3, params, *, K, rate, return_features=True,
                  out_dtype=jnp.float32):
    Cin, H, N = x3.shape
    w1, s1, t1, wdw, s2, t2, w2 = params
    Cmid = w1.shape[0]
    out_isz = jnp.dtype(out_dtype).itemsize

    cap, budget = _vmem_caps()
    bpc = _bytes_per_col(Cin, Cmid, H, out_isz, return_features)
    T = _pick_col_tile(N, bpc, budget)
    grid = (N // T,)

    smem = pl.BlockSpec(memory_space=pltpu.MemorySpace.SMEM)
    x_spec = pl.BlockSpec((Cin, H, T), lambda i: (0, 0, i))
    out_spec = pl.BlockSpec((Cin, H, T), lambda i: (0, 0, i))
    feat_spec = pl.BlockSpec((Cmid, H, T), lambda i: (0, 0, i))

    kernel = functools.partial(_tcm_kernel, K=K, rate=rate, Cin=Cin, Cmid=Cmid,
                               H=H, chunk=_LANE_CHUNK,
                               with_features=return_features)

    if return_features:
        out_shape = (jax.ShapeDtypeStruct((Cin, H, N), out_dtype),
                     jax.ShapeDtypeStruct((Cmid, H, N), out_dtype))
        out_specs = (out_spec, feat_spec)
    else:
        out_shape = jax.ShapeDtypeStruct((Cin, H, N), out_dtype)
        out_specs = out_spec

    result = pl.pallas_call(
        kernel,
        out_shape=out_shape,
        grid=grid,
        in_specs=[x_spec] + [smem] * 7,
        out_specs=out_specs,
        compiler_params=pltpu.CompilerParams(
            dimension_semantics=("parallel",),
            vmem_limit_bytes=_vmem_limit(cap, bpc * T)),
    )(x3, w1, s1, t1, wdw, s2, t2, w2)

    if return_features:
        return result
    return result, None


# ----------------------------------------------------------------------------
# Direct NCHW path (W % 128 == 0): no host-side transposes, batch squeezed.
# ----------------------------------------------------------------------------
def _tcm_layer_nchw_direct(x_nchw, params, *, K, rate, return_features,
                           out_dtype):
    B, Cin, H, W = x_nchw.shape
    w1, s1, t1, wdw, s2, t2, w2 = params
    Cmid = w1.shape[0]
    out_isz = jnp.dtype(out_dtype).itemsize

    cap, budget = _vmem_caps()
    bpc = _bytes_per_col(Cin, Cmid, H, out_isz, return_features)
    Wt = _pick_col_tile(W, bpc, budget, parallel_factor=B)
    grid = (B, W // Wt)

    smem = pl.BlockSpec(memory_space=pltpu.MemorySpace.SMEM)
    x_spec = pl.BlockSpec((None, Cin, H, Wt), lambda b, w: (b, 0, 0, w))
    out_spec = pl.BlockSpec((None, Cin, H, Wt), lambda b, w: (b, 0, 0, w))
    feat_spec = pl.BlockSpec((None, Cmid, H, Wt), lambda b, w: (b, 0, 0, w))

    kernel = functools.partial(_tcm_kernel, K=K, rate=rate, Cin=Cin, Cmid=Cmid,
                               H=H, chunk=_LANE_CHUNK,
                               with_features=return_features)

    if return_features:
        out_shape = (jax.ShapeDtypeStruct((B, Cin, H, W), out_dtype),
                     jax.ShapeDtypeStruct((B, Cmid, H, W), out_dtype))
        out_specs = (out_spec, feat_spec)
    else:
        out_shape = jax.ShapeDtypeStruct((B, Cin, H, W), out_dtype)
        out_specs = out_spec

    result = pl.pallas_call(
        kernel,
        out_shape=out_shape,
        grid=grid,
        in_specs=[x_spec] + [smem] * 7,
        out_specs=out_specs,
        compiler_params=pltpu.CompilerParams(
            dimension_semantics=("parallel", "parallel"),
            vmem_limit_bytes=_vmem_limit(cap, bpc * Wt)),
    )(x_nchw, w1, s1, t1, wdw, s2, t2, w2)

    if return_features:
        return result
    return result, None


# ----------------------------------------------------------------------------
# NCHW wrapper (PyTorch interface).
# ----------------------------------------------------------------------------
def tcm_layer(x_nchw, params, *, K, rate, return_features=True,
              out_dtype=jnp.float32):
    B, Cin, H, W = x_nchw.shape
    Cmid = params[0].shape[0]
    if W % 128 == 0:
        return _tcm_layer_nchw_direct(x_nchw, params, K=K, rate=rate,
                                      return_features=return_features,
                                      out_dtype=out_dtype)
    # Fallback for small / ragged W: flatten spatial to (Cin, H, B*W) so the
    # lane axis is as dense as possible.
    x3 = jnp.transpose(x_nchw, (1, 2, 0, 3)).reshape(Cin, H, B * W)
    out3, feat3 = tcm_layer_chn(x3, params, K=K, rate=rate,
                                return_features=return_features,
                                out_dtype=out_dtype)
    out = jnp.transpose(out3.reshape(Cin, H, B, W), (2, 0, 1, 3))
    if not return_features:
        return out, None
    feat = jnp.transpose(feat3.reshape(Cmid, H, B, W), (2, 0, 1, 3))
    return out, feat


# ----------------------------------------------------------------------------
# Pure-JAX reference (exact f32 broadcast-sums).
# ----------------------------------------------------------------------------
def tcm_ref(x_nchw, params, *, K, rate):
    w1, s1, t1, wdw, s2, t2, w2 = params
    B, Cin, H, W = x_nchw.shape
    Cmid = w1.shape[0]
    x = jnp.transpose(x_nchw, (0, 3, 2, 1)).reshape(B * W, H, Cin)   # (N, H, Cin)

    h1 = (x[:, :, None, :] * w1[None, None, :, :]).sum(-1)           # (N, H, Cmid)
    h1 = jnp.maximum(h1 * s1 + t1, 0.0)

    pad = (K - 1) * rate
    h1p = jnp.pad(h1, ((0, 0), (pad, 0), (0, 0)))
    y = jnp.zeros((B * W, H, Cmid), jnp.float32)
    for k in range(K):
        y = y + h1p[:, k * rate:k * rate + H, :] * wdw[k][None, None, :]
    y = jnp.maximum(y * s2 + t2, 0.0)

    out = (y[:, :, None, :] * w2[None, None, :, :]).sum(-1) + x      # (N, H, Cin)
    out_nchw = jnp.transpose(out.reshape(B, W, H, Cin), (0, 3, 2, 1))
    feat_nchw = jnp.transpose(h1.reshape(B, W, H, Cmid), (0, 3, 2, 1))
    return out_nchw, feat_nchw


# ----------------------------------------------------------------------------
# Deterministic parameter construction (xavier-normal-like conv weights,
# synthetic BatchNorm stats folded into scale/shift).
# ----------------------------------------------------------------------------
def make_params(key, Cin, Cmid, K):
    ks = jax.random.split(key, 8)
    eps = 1e-3

    def xavier(k, shape, fan_in, fan_out):
        std = float(np.sqrt(2.0 / (fan_in + fan_out)))
        return jax.random.normal(k, shape, jnp.float32) * std

    w1 = xavier(ks[0], (Cmid, Cin), Cin, Cmid)            # conv_first  (Cmid,Cin,1,1)
    wdw = jnp.transpose(xavier(ks[1], (Cmid, K), K, K))   # depthwise   -> (K, Cmid)
    w2 = xavier(ks[2], (Cin, Cmid), Cmid, Cin)            # conv_second (Cin,Cmid,1,1)

    def bn_fold(kg, kb, km, kv, C):
        gamma = 1.0 + 0.1 * jax.random.normal(kg, (C,), jnp.float32)
        beta = 0.1 * jax.random.normal(kb, (C,), jnp.float32)
        mean = 0.1 * jax.random.normal(km, (C,), jnp.float32)
        var = jnp.abs(jax.random.normal(kv, (C,), jnp.float32)) + 0.5
        scale = gamma / jnp.sqrt(var + eps)
        shift = beta - mean * scale
        return scale, shift

    s1, t1 = bn_fold(ks[3], ks[4], ks[5], ks[6], Cmid)
    s2, t2 = bn_fold(ks[7], ks[3], ks[5], ks[4], Cmid)
    return (w1, s1, t1, wdw, s2, t2, w2)


if __name__ == "__main__":
    key = jax.random.PRNGKey(0)
    Cin, Cmid, K, rate = 4, 8, 3, 2
    kx1, kx2, kx3, kp = jax.random.split(key, 4)
    params = make_params(kp, Cin, Cmid, K)

    # --- Test 1: small ragged spatial (fallback path, single tile) -----------
    B, H, W = 2, 16, 16
    x = jax.random.normal(kx1, (B, Cin, H, W), jnp.float32)
    out, feat = tcm_layer(x, params, K=K, rate=rate)
    out, feat = jax.block_until_ready((out, feat))
    out_r, feat_r = tcm_ref(x, params, K=K, rate=rate)
    np.testing.assert_allclose(np.asarray(out), np.asarray(out_r), rtol=1e-5, atol=1e-5)
    np.testing.assert_allclose(np.asarray(feat), np.asarray(feat_r), rtol=1e-5, atol=1e-5)
    assert out.shape == (B, Cin, H, W) and feat.shape == (B, Cmid, H, W)

    # --- Test 2: W % 128 == 0 -> direct NCHW path (no wrapper transposes) ----
    B2, W2 = 2, 128
    x2 = jax.random.normal(kx2, (B2, Cin, H, W2), jnp.float32)
    out2, feat2 = tcm_layer(x2, params, K=K, rate=rate)
    out2, feat2 = jax.block_until_ready((out2, feat2))
    out2_r, feat2_r = tcm_ref(x2, params, K=K, rate=rate)
    np.testing.assert_allclose(np.asarray(out2), np.asarray(out2_r), rtol=1e-5, atol=1e-5)
    np.testing.assert_allclose(np.asarray(feat2), np.asarray(feat2_r), rtol=1e-5, atol=1e-5)

    # --- Test 3: larger flattened spatial -> multi-step grid + chunk loop ----
    B3, W3 = 2, 256
    x3n = jax.random.normal(kx3, (B3, Cin, H, W3), jnp.float32)
    x3c = jnp.transpose(x3n, (1, 2, 0, 3)).reshape(Cin, H, B3 * W3)
    out3, feat3 = tcm_layer_chn(x3c, params, K=K, rate=rate)
    out3, feat3 = jax.block_until_ready((out3, feat3))
    out3_r, feat3_r = tcm_ref(x3n, params, K=K, rate=rate)
    out3_r_c = jnp.transpose(out3_r, (1, 2, 0, 3)).reshape(Cin, H, B3 * W3)
    feat3_r_c = jnp.transpose(feat3_r, (1, 2, 0, 3)).reshape(Cmid, H, B3 * W3)
    np.testing.assert_allclose(np.asarray(out3), np.asarray(out3_r_c), rtol=1e-5, atol=1e-5)
    np.testing.assert_allclose(np.asarray(feat3), np.asarray(feat3_r_c), rtol=1e-5, atol=1e-5)

    # --- return_features=False skips the h1 writeback entirely ---------------
    out_only, none_feat = tcm_layer(x, params, K=K, rate=rate, return_features=False)
    out_only = jax.block_until_ready(out_only)
    assert none_feat is None
    np.testing.assert_allclose(np.asarray(out_only), np.asarray(out_r), rtol=1e-5, atol=1e-5)

    # --- optional bf16 output (f32 compute, halved HBM writeback) ------------
    out_bf, feat_bf = tcm_layer(x2, params, K=K, rate=rate, out_dtype=jnp.bfloat16)
    out_bf, feat_bf = jax.block_until_ready((out_bf, feat_bf))
    assert out_bf.dtype == jnp.bfloat16 and feat_bf.dtype == jnp.bfloat16
    np.testing.assert_allclose(np.asarray(out_bf, dtype=np.float32),
                               np.asarray(out2_r), rtol=5e-2, atol=5e-2)

    print("KERNEL_OK")
</pallas_src>

<mosaic_0001>
module attributes {stable_mosaic.version = 11 : i64} {
  func.func @_tcm_kernel(%arg0: i32, %arg1: memref<4x16x32xf32, #tpu.memory_space<vmem>>, %arg2: memref<8x4xf32, #tpu.memory_space<smem>>, %arg3: memref<8xf32, #tpu.memory_space<smem>>, %arg4: memref<8xf32, #tpu.memory_space<smem>>, %arg5: memref<3x8xf32, #tpu.memory_space<smem>>, %arg6: memref<8xf32, #tpu.memory_space<smem>>, %arg7: memref<8xf32, #tpu.memory_space<smem>>, %arg8: memref<4x8xf32, #tpu.memory_space<smem>>, %arg9: memref<4x16x32xf32, #tpu.memory_space<vmem>>, %arg10: memref<8x16x32xf32, #tpu.memory_space<vmem>>) attributes {dimension_semantics = [#tpu.dimension_semantics<parallel>], iteration_bounds = array<i64: 1>, scalar_prefetch = 0 : i64, scratch_operands = 0 : i64, tpu.core_type = #tpu.core_type<tc>, window_params = [{transform_indices = @transform_0, window_bounds = array<i64: 4, 16, 32>}, {transform_indices = @transform_1, window_bounds = array<i64: 8, 4>}, {transform_indices = @transform_2, window_bounds = array<i64: 8>}, {transform_indices = @transform_3, window_bounds = array<i64: 8>}, {transform_indices = @transform_4, window_bounds = array<i64: 3, 8>}, {transform_indices = @transform_5, window_bounds = array<i64: 8>}, {transform_indices = @transform_6, window_bounds = array<i64: 8>}, {transform_indices = @transform_7, window_bounds = array<i64: 4, 8>}, {transform_indices = @transform_8, window_bounds = array<i64: 4, 16, 32>}, {transform_indices = @transform_9, window_bounds = array<i64: 8, 16, 32>}]} {
    %0 = tpu.iota {dimensions = array<i32: 0>} : vector<16x32xi32>
    %c4_i32 = arith.constant 4 : i32
    %1 = vector.broadcast %c4_i32 : i32 to vector<16x32xi32>
    %2 = arith.cmpi sge, %0, %1 : vector<16x32xi32>
    %c2_i32 = arith.constant 2 : i32
    %3 = vector.broadcast %c2_i32 : i32 to vector<16x32xi32>
    %4 = arith.cmpi sge, %0, %3 : vector<16x32xi32>
    %c0 = arith.constant 0 : index
    %c0_0 = arith.constant 0 : index
    %c0_1 = arith.constant 0 : index
    %5 = vector.load %arg1[%c0, %c0_0, %c0_1] : memref<4x16x32xf32, #tpu.memory_space<vmem>>, vector<1x16x32xf32>
    %6 = vector.shape_cast %5 : vector<1x16x32xf32> to vector<16x32xf32>
    %c1 = arith.constant 1 : index
    %c0_2 = arith.constant 0 : index
    %c0_3 = arith.constant 0 : index
    %7 = vector.load %arg1[%c1, %c0_2, %c0_3] : memref<4x16x32xf32, #tpu.memory_space<vmem>>, vector<1x16x32xf32>
    %8 = vector.shape_cast %7 : vector<1x16x32xf32> to vector<16x32xf32>
    %c2 = arith.constant 2 : index
    %c0_4 = arith.constant 0 : index
    %c0_5 = arith.constant 0 : index
    %9 = vector.load %arg1[%c2, %c0_4, %c0_5] : memref<4x16x32xf32, #tpu.memory_space<vmem>>, vector<1x16x32xf32>
    %10 = vector.shape_cast %9 : vector<1x16x32xf32> to vector<16x32xf32>
    %c3 = arith.constant 3 : index
    %c0_6 = arith.constant 0 : index
    %c0_7 = arith.constant 0 : index
    %11 = vector.load %arg1[%c3, %c0_6, %c0_7] : memref<4x16x32xf32, #tpu.memory_space<vmem>>, vector<1x16x32xf32>
    %12 = vector.shape_cast %11 : vector<1x16x32xf32> to vector<16x32xf32>
    %c0_8 = arith.constant 0 : index
    %c0_9 = arith.constant 0 : index
    %13 = memref.load %arg2[%c0_8, %c0_9] : memref<8x4xf32, #tpu.memory_space<smem>>
    %14 = vector.broadcast %13 : f32 to vector<16x32xf32>
    %15 = arith.mulf %6, %14 : vector<16x32xf32>
    %c0_10 = arith.constant 0 : index
    %c1_11 = arith.constant 1 : index
    %16 = memref.load %arg2[%c0_10, %c1_11] : memref<8x4xf32, #tpu.memory_space<smem>>
    %17 = vector.broadcast %16 : f32 to vector<16x32xf32>
    %18 = arith.mulf %8, %17 : vector<16x32xf32>
    %19 = arith.addf %15, %18 : vector<16x32xf32>
    %c0_12 = arith.constant 0 : index
    %c2_13 = arith.constant 2 : index
    %20 = memref.load %arg2[%c0_12, %c2_13] : memref<8x4xf32, #tpu.memory_space<smem>>
    %21 = vector.broadcast %20 : f32 to vector<16x32xf32>
    %22 = arith.mulf %10, %21 : vector<16x32xf32>
    %23 = arith.addf %19, %22 : vector<16x32xf32>
    %c0_14 = arith.constant 0 : index
    %c3_15 = arith.constant 3 : index
    %24 = memref.load %arg2[%c0_14, %c3_15] : memref<8x4xf32, #tpu.memory_space<smem>>
    %25 = vector.broadcast %24 : f32 to vector<16x32xf32>
    %26 = arith.mulf %12, %25 : vector<16x32xf32>
    %27 = arith.addf %23, %26 : vector<16x32xf32>
    %c0_16 = arith.constant 0 : index
    %28 = memref.load %arg3[%c0_16] : memref<8xf32, #tpu.memory_space<smem>>
    %29 = vector.broadcast %28 : f32 to vector<16x32xf32>
    %30 = arith.mulf %27, %29 : vector<16x32xf32>
    %c0_17 = arith.constant 0 : index
    %31 = memref.load %arg4[%c0_17] : memref<8xf32, #tpu.memory_space<smem>>
    %32 = vector.broadcast %31 : f32 to vector<16x32xf32>
    %33 = arith.addf %30, %32 : vector<16x32xf32>
    %cst = arith.constant 0.000000e+00 : f32
    %34 = vector.broadcast %cst : f32 to vector<16x32xf32>
    %35 = arith.maximumf %33, %34 : vector<16x32xf32>
    %c0_18 = arith.constant 0 : index
    %c0_19 = arith.constant 0 : index
    %c0_20 = arith.constant 0 : index
    %36 = vector.load %arg10[%c0_18, %c0_19, %c0_20] : memref<8x16x32xf32, #tpu.memory_space<vmem>>, vector<1x16x32xf32>
    %37 = vector.shape_cast %36 : vector<1x16x32xf32> to vector<16x32xf32>
    %38 = vector.shape_cast %35 : vector<16x32xf32> to vector<1x16x32xf32>
    tpu.vector_store %arg10[%c0_18, %c0_19, %c0_20], %38 {strides = array<i32>} : memref<8x16x32xf32, #tpu.memory_space<vmem>>, vector<1x16x32xf32>,
    %c2_21 = arith.constant 2 : index
    %c0_22 = arith.constant 0 : index
    %39 = memref.load %arg5[%c2_21, %c0_22] : memref<3x8xf32, #tpu.memory_space<smem>>
    %40 = vector.broadcast %39 : f32 to vector<16x32xf32>
    %41 = arith.mulf %35, %40 : vector<16x32xf32>
    %c4_i32_23 = arith.constant 4 : i32
    %42 = tpu.dynamic_rotate %35 by %c4_i32_23 dim 0 : vector<16x32xf32>, i32 -> vector<16x32xf32>
    %cst_24 = arith.constant 0.000000e+00 : f32
    %43 = vector.broadcast %cst_24 : f32 to vector<16x32xf32>
    %44 = arith.select %2, %42, %43 : vector<16x32xi1>, vector<16x32xf32>
    %c0_25 = arith.constant 0 : index
    %c0_26 = arith.constant 0 : index
    %45 = memref.load %arg5[%c0_25, %c0_26] : memref<3x8xf32, #tpu.memory_space<smem>>
    %46 = vector.broadcast %45 : f32 to vector<16x32xf32>
    %47 = arith.mulf %44, %46 : vector<16x32xf32>
    %48 = arith.addf %41, %47 : vector<16x32xf32>
    %c2_i32_27 = arith.constant 2 : i32
    %49 = tpu.dynamic_rotate %35 by %c2_i32_27 dim 0 : vector<16x32xf32>, i32 -> vector<16x32xf32>
    %cst_28 = arith.constant 0.000000e+00 : f32
    %50 = vector.broadcast %cst_28 : f32 to vector<16x32xf32>
    %51 = arith.select %4, %49, %50 : vector<16x32xi1>, vector<16x32xf32>
    %c1_29 = arith.constant 1 : index
    %c0_30 = arith.constant 0 : index
    %52 = memref.load %arg5[%c1_29, %c0_30] : memref<3x8xf32, #tpu.memory_space<smem>>
    %53 = vector.broadcast %52 : f32 to vector<16x32xf32>
    %54 = arith.mulf %51, %53 : vector<16x32xf32>
    %55 = arith.addf %48, %54 : vector<16x32xf32>
    %c0_31 = arith.constant 0 : index
    %56 = memref.load %arg6[%c0_31] : memref<8xf32, #tpu.memory_space<smem>>
    %57 = vector.broadcast %56 : f32 to vector<16x32xf32>
    %58 = arith.mulf %55, %57 : vector<16x32xf32>
    %c0_32 = arith.constant 0 : index
    %59 = memref.load %arg7[%c0_32] : memref<8xf32, #tpu.memory_space<smem>>
    %60 = vector.broadcast %59 : f32 to vector<16x32xf32>
    %61 = arith.addf %58, %60 : vector<16x32xf32>
    %cst_33 = arith.constant 0.000000e+00 : f32
    %62 = vector.broadcast %cst_33 : f32 to vector<16x32xf32>
    %63 = arith.maximumf %61, %62 : vector<16x32xf32>
    %c0_34 = arith.constant 0 : index
    %c0_35 = arith.constant 0 : index
    %64 = memref.load %arg8[%c0_34, %c0_35] : memref<4x8xf32, #tpu.memory_space<smem>>
    %65 = vector.broadcast %64 : f32 to vector<16x32xf32>
    %66 = arith.mulf %63, %65 : vector<16x32xf32>
    %67 = arith.addf %6, %66 : vector<16x32xf32>
    %c1_36 = arith.constant 1 : index
    %c0_37 = arith.constant 0 : index
    %68 = memref.load %arg8[%c1_36, %c0_37] : memref<4x8xf32, #tpu.memory_space<smem>>
    %69 = vector.broadcast %68 : f32 to vector<16x32xf32>
    %70 = arith.mulf %63, %69 : vector<16x32xf32>
    %71 = arith.addf %8, %70 : vector<16x32xf32>
    %c2_38 = arith.constant 2 : index
    %c0_39 = arith.constant 0 : index
    %72 = memref.load %arg8[%c2_38, %c0_39] : memref<4x8xf32, #tpu.memory_space<smem>>
    %73 = vector.broadcast %72 : f32 to vector<16x32xf32>
    %74 = arith.mulf %63, %73 : vector<16x32xf32>
    %75 = arith.addf %10, %74 : vector<16x32xf32>
    %c3_40 = arith.constant 3 : index
    %c0_41 = arith.constant 0 : index
    %76 = memref.load %arg8[%c3_40, %c0_41] : memref<4x8xf32, #tpu.memory_space<smem>>
    %77 = vector.broadcast %76 : f32 to vector<16x32xf32>
    %78 = arith.mulf %63, %77 : vector<16x32xf32>
    %79 = arith.addf %12, %78 : vector<16x32xf32>
    %c1_42 = arith.constant 1 : index
    %c0_43 = arith.constant 0 : index
    %80 = memref.load %arg2[%c1_42, %c0_43] : memref<8x4xf32, #tpu.memory_space<smem>>
    %81 = vector.broadcast %80 : f32 to vector<16x32xf32>
    %82 = arith.mulf %6, %81 : vector<16x32xf32>
    %c1_44 = arith.constant 1 : index
    %c1_45 = arith.constant 1 : index
    %83 = memref.load %arg2[%c1_44, %c1_45] : memref<8x4xf32, #tpu.memory_space<smem>>
    %84 = vector.broadcast %83 : f32 to vector<16x32xf32>
    %85 = arith.mulf %8, %84 : vector<16x32xf32>
    %86 = arith.addf %82, %85 : vector<16x32xf32>
    %c1_46 = arith.constant 1 : index
    %c2_47 = arith.constant 2 : index
    %87 = memref.load %arg2[%c1_46, %c2_47] : memref<8x4xf32, #tpu.memory_space<smem>>
    %88 = vector.broadcast %87 : f32 to vector<16x32xf32>
    %89 = arith.mulf %10, %88 : vector<16x32xf32>
    %90 = arith.addf %86, %89 : vector<16x32xf32>
    %c1_48 = arith.constant 1 : index
    %c3_49 = arith.constant 3 : index
    %91 = memref.load %arg2[%c1_48, %c3_49] : memref<8x4xf32, #tpu.memory_space<smem>>
    %92 = vector.broadcast %91 : f32 to vector<16x32xf32>
    %93 = arith.mulf %12, %92 : vector<16x32xf32>
    %94 = arith.addf %90, %93 : vector<16x32xf32>
    %c1_50 = arith.constant 1 : index
    %95 = memref.load %arg3[%c1_50] : memref<8xf32, #tpu.memory_space<smem>>
    %96 = vector.broadcast %95 : f32 to vector<16x32xf32>
    %97 = arith.mulf %94, %96 : vector<16x32xf32>
    %c1_51 = arith.constant 1 : index
    %98 = memref.load %arg4[%c1_51] : memref<8xf32, #tpu.memory_space<smem>>
    %99 = vector.broadcast %98 : f32 to vector<16x32xf32>
    %100 = arith.addf %97, %99 : vector<16x32xf32>
    %cst_52 = arith.constant 0.000000e+00 : f32
    %101 = vector.broadcast %cst_52 : f32 to vector<16x32xf32>
    %102 = arith.maximumf %100, %101 : vector<16x32xf32>
    %c1_53 = arith.constant 1 : index
    %c0_54 = arith.constant 0 : index
    %c0_55 = arith.constant 0 : index
    %103 = vector.load %arg10[%c1_53, %c0_54, %c0_55] : memref<8x16x32xf32, #tpu.memory_space<vmem>>, vector<1x16x32xf32>
    %104 = vector.shape_cast %103 : vector<1x16x32xf32> to vector<16x32xf32>
    %105 = vector.shape_cast %102 : vector<16x32xf32> to vector<1x16x32xf32>
    tpu.vector_store %arg10[%c1_53, %c0_54, %c0_55], %105 {strides = array<i32>} : memref<8x16x32xf32, #tpu.memory_space<vmem>>, vector<1x16x32xf32>,
    %c2_56 = arith.constant 2 : index
    %c1_57 = arith.constant 1 : index
    %106 = memref.load %arg5[%c2_56, %c1_57] : memref<3x8xf32, #tpu.memory_space<smem>>
    %107 = vector.broadcast %106 : f32 to vector<16x32xf32>
    %108 = arith.mulf %102, %107 : vector<16x32xf32>
    %c4_i32_58 = arith.constant 4 : i32
    %109 = tpu.dynamic_rotate %102 by %c4_i32_58 dim 0 : vector<16x32xf32>, i32 -> vector<16x32xf32>
    %cst_59 = arith.constant 0.000000e+00 : f32
    %110 = vector.broadcast %cst_59 : f32 to vector<16x32xf32>
    %111 = arith.select %2, %109, %110 : vector<16x32xi1>, vector<16x32xf32>
    %c0_60 = arith.constant 0 : index
    %c1_61 = arith.constant 1 : index
    %112 = memref.load %arg5[%c0_60, %c1_61] : memref<3x8xf32, #tpu.memory_space<smem>>
    %113 = vector.broadcast %112 : f32 to vector<16x32xf32>
    %114 = arith.mulf %111, %113 : vector<16x32xf32>
    %115 = arith.addf %108, %114 : vector<16x32xf32>
    %c2_i32_62 = arith.constant 2 : i32
    %116 = tpu.dynamic_rotate %102 by %c2_i32_62 dim 0 : vector<16x32xf32>, i32 -> vector<16x32xf32>
    %cst_63 = arith.constant 0.000000e+00 : f32
    %117 = vector.broadcast %cst_63 : f32 to vector<16x32xf32>
    %118 = arith.select %4, %116, %117 : vector<16x32xi1>, vector<16x32xf32>
    %c1_64 = arith.constant 1 : index
    %c1_65 = arith.constant 1 : index
    %119 = memref.load %arg5[%c1_64, %c1_65] : memref<3x8xf32, #tpu.memory_space<smem>>
    %120 = vector.broadcast %119 : f32 to vector<16x32xf32>
    %121 = arith.mulf %118, %120 : vector<16x32xf32>
    %122 = arith.addf %115, %121 : vector<16x32xf32>
    %c1_66 = arith.constant 1 : index
    %123 = memref.load %arg6[%c1_66] : memref<8xf32, #tpu.memory_space<smem>>
    %124 = vector.broadcast %123 : f32 to vector<16x32xf32>
    %125 = arith.mulf %122, %124 : vector<16x32xf32>
    %c1_67 = arith.constant 1 : index
    %126 = memref.load %arg7[%c1_67] : memref<8xf32, #tpu.memory_space<smem>>
    %127 = vector.broadcast %126 : f32 to vector<16x32xf32>
    %128 = arith.addf %125, %127 : vector<16x32xf32>
    %cst_68 = arith.constant 0.000000e+00 : f32
    %129 = vector.broadcast %cst_68 : f32 to vector<16x32xf32>
    %130 = arith.maximumf %128, %129 : vector<16x32xf32>
    %c0_69 = arith.constant 0 : index
    %c1_70 = arith.constant 1 : index
    %131 = memref.load %arg8[%c0_69, %c1_70] : memref<4x8xf32, #tpu.memory_space<smem>>
    %132 = vector.broadcast %131 : f32 to vector<16x32xf32>
    %133 = arith.mulf %130, %132 : vector<16x32xf32>
    %134 = arith.addf %67, %133 : vector<16x32xf32>
    %c1_71 = arith.constant 1 : index
    %c1_72 = arith.constant 1 : index
    %135 = memref.load %arg8[%c1_71, %c1_72] : memref<4x8xf32, #tpu.memory_space<smem>>
    %136 = vector.broadcast %135 : f32 to vector<16x32xf32>
    %137 = arith.mulf %130, %136 : vector<16x32xf32>
    %138 = arith.addf %71, %137 : vector<16x32xf32>
    %c2_73 = arith.constant 2 : index
    %c1_74 = arith.constant 1 : index
    %139 = memref.load %arg8[%c2_73, %c1_74] : memref<4x8xf32, #tpu.memory_space<smem>>
    %140 = vector.broadcast %139 : f32 to vector<16x32xf32>
    %141 = arith.mulf %130, %140 : vector<16x32xf32>
    %142 = arith.addf %75, %141 : vector<16x32xf32>
    %c3_75 = arith.constant 3 : index
    %c1_76 = arith.constant 1 : index
    %143 = memref.load %arg8[%c3_75, %c1_76] : memref<4x8xf32, #tpu.memory_space<smem>>
    %144 = vector.broadcast %143 : f32 to vector<16x32xf32>
    %145 = arith.mulf %130, %144 : vector<16x32xf32>
    %146 = arith.addf %79, %145 : vector<16x32xf32>
    %c2_77 = arith.constant 2 : index
    %c0_78 = arith.constant 0 : index
    %147 = memref.load %arg2[%c2_77, %c0_78] : memref<8x4xf32, #tpu.memory_space<smem>>
    %148 = vector.broadcast %147 : f32 to vector<16x32xf32>
    %149 = arith.mulf %6, %148 : vector<16x32xf32>
    %c2_79 = arith.constant 2 : index
    %c1_80 = arith.constant 1 : index
    %150 = memref.load %arg2[%c2_79, %c1_80] : memref<8x4xf32, #tpu.memory_space<smem>>
    %151 = vector.broadcast %150 : f32 to vector<16x32xf32>
    %152 = arith.mulf %8, %151 : vector<16x32xf32>
    %153 = arith.addf %149, %152 : vector<16x32xf32>
    %c2_81 = arith.constant 2 : index
    %c2_82 = arith.constant 2 : index
    %154 = memref.load %arg2[%c2_81, %c2_82] : memref<8x4xf32, #tpu.memory_space<smem>>
    %155 = vector.broadcast %154 : f32 to vector<16x32xf32>
    %156 = arith.mulf %10, %155 : vector<16x32xf32>
    %157 = arith.addf %153, %156 : vector<16x32xf32>
    %c2_83 = arith.constant 2 : index
    %c3_84 = arith.constant 3 : index
    %158 = memref.load %arg2[%c2_83, %c3_84] : memref<8x4xf32, #tpu.memory_space<smem>>
    %159 = vector.broadcast %158 : f32 to vector<16x32xf32>
    %160 = arith.mulf %12, %159 : vector<16x32xf32>
    %161 = arith.addf %157, %160 : vector<16x32xf32>
    %c2_85 = arith.constant 2 : index
    %162 = memref.load %arg3[%c2_85] : memref<8xf32, #tpu.memory_space<smem>>
    %163 = vector.broadcast %162 : f32 to vector<16x32xf32>
    %164 = arith.mulf %161, %163 : vector<16x32xf32>
    %c2_86 = arith.constant 2 : index
    %165 = memref.load %arg4[%c2_86] : memref<8xf32, #tpu.memory_space<smem>>
    %166 = vector.broadcast %165 : f32 to vector<16x32xf32>
    %167 = arith.addf %164, %166 : vector<16x32xf32>
    %cst_87 = arith.constant 0.000000e+00 : f32
    %168 = vector.broadcast %cst_87 : f32 to vector<16x32xf32>
    %169 = arith.maximumf %167, %168 : vector<16x32xf32>
    %c2_88 = arith.constant 2 : index
    %c0_89 = arith.constant 0 : index
    %c0_90 = arith.constant 0 : index
    %170 = vector.load %arg10[%c2_88, %c0_89, %c0_90] : memref<8x16x32xf32, #tpu.memory_space<vmem>>, vector<1x16x32xf32>
    %171 = vector.shape_cast %170 : vector<1x16x32xf32> to vector<16x32xf32>
    %172 = vector.shape_cast %169 : vector<16x32xf32> to vector<1x16x32xf32>
    tpu.vector_store %arg10[%c2_88, %c0_89, %c0_90], %172 {strides = array<i32>} : memref<8x16x32xf32, #tpu.memory_space<vmem>>, vector<1x16x32xf32>,
    %c2_91 = arith.constant 2 : index
    %c2_92 = arith.constant 2 : index
    %173 = memref.load %arg5[%c2_91, %c2_92] : memref<3x8xf32, #tpu.memory_space<smem>>
    %174 = vector.broadcast %173 : f32 to vector<16x32xf32>
    %175 = arith.mulf %169, %174 : vector<16x32xf32>
    %c4_i32_93 = arith.constant 4 : i32
    %176 = tpu.dynamic_rotate %169 by %c4_i32_93 dim 0 : vector<16x32xf32>, i32 -> vector<16x32xf32>
    %cst_94 = arith.constant 0.000000e+00 : f32
    %177 = vector.broadcast %cst_94 : f32 to vector<16x32xf32>
    %178 = arith.select %2, %176, %177 : vector<16x32xi1>, vector<16x32xf32>
    %c0_95 = arith.constant 0 : index
    %c2_96 = arith.constant 2 : index
    %179 = memref.load %arg5[%c0_95, %c2_96] : memref<3x8xf32, #tpu.memory_space<smem>>
    %180 = vector.broadcast %179 : f32 to vector<16x32xf32>
    %181 = arith.mulf %178, %180 : vector<16x32xf32>
    %182 = arith.addf %175, %181 : vector<16x32xf32>
    %c2_i32_97 = arith.constant 2 : i32
    %183 = tpu.dynamic_rotate %169 by %c2_i32_97 dim 0 : vector<16x32xf32>, i32 -> vector<16x32xf32>
    %cst_98 = arith.constant 0.000000e+00 : f32
    %184 = vector.broadcast %cst_98 : f32 to vector<16x32xf32>
    %185 = arith.select %4, %183, %184 : vector<16x32xi1>, vector<16x32xf32>
    %c1_99 = arith.constant 1 : index
    %c2_100 = arith.constant 2 : index
    %186 = memref.load %arg5[%c1_99, %c2_100] : memref<3x8xf32, #tpu.memory_space<smem>>
    %187 = vector.broadcast %186 : f32 to vector<16x32xf32>
    %188 = arith.mulf %185, %187 : vector<16x32xf32>
    %189 = arith.addf %182, %188 : vector<16x32xf32>
    %c2_101 = arith.constant 2 : index
    %190 = memref.load %arg6[%c2_101] : memref<8xf32, #tpu.memory_space<smem>>
    %191 = vector.broadcast %190 : f32 to vector<16x32xf32>
    %192 = arith.mulf %189, %191 : vector<16x32xf32>
    %c2_102 = arith.constant 2 : index
    %193 = memref.load %arg7[%c2_102] : memref<8xf32, #tpu.memory_space<smem>>
    %194 = vector.broadcast %193 : f32 to vector<16x32xf32>
    %195 = arith.addf %192, %194 : vector<16x32xf32>
    %cst_103 = arith.constant 0.000000e+00 : f32
    %196 = vector.broadcast %cst_103 : f32 to vector<16x32xf32>
    %197 = arith.maximumf %195, %196 : vector<16x32xf32>
    %c0_104 = arith.constant 0 : index
    %c2_105 = arith.constant 2 : index
    %198 = memref.load %arg8[%c0_104, %c2_105] : memref<4x8xf32, #tpu.memory_space<smem>>
    %199 = vector.broadcast %198 : f32 to vector<16x32xf32>
    %200 = arith.mulf %197, %199 : vector<16x32xf32>
    %201 = arith.addf %134, %200 : vector<16x32xf32>
    %c1_106 = arith.constant 1 : index
    %c2_107 = arith.constant 2 : index
    %202 = memref.load %arg8[%c1_106, %c2_107] : memref<4x8xf32, #tpu.memory_space<smem>>
    %203 = vector.broadcast %202 : f32 to vector<16x32xf32>
    %204 = arith.mulf %197, %203 : vector<16x32xf32>
    %205 = arith.addf %138, %204 : vector<16x32xf32>
    %c2_108 = arith.constant 2 : index
    %c2_109 = arith.constant 2 : index
    %206 = memref.load %arg8[%c2_108, %c2_109] : memref<4x8xf32, #tpu.memory_space<smem>>
    %207 = vector.broadcast %206 : f32 to vector<16x32xf32>
    %208 = arith.mulf %197, %207 : vector<16x32xf32>
    %209 = arith.addf %142, %208 : vector<16x32xf32>
    %c3_110 = arith.constant 3 : index
    %c2_111 = arith.constant 2 : index
    %210 = memref.load %arg8[%c3_110, %c2_111] : memref<4x8xf32, #tpu.memory_space<smem>>
    %211 = vector.broadcast %210 : f32 to vector<16x32xf32>
    %212 = arith.mulf %197, %211 : vector<16x32xf32>
    %213 = arith.addf %146, %212 : vector<16x32xf32>
    %c3_112 = arith.constant 3 : index
    %c0_113 = arith.constant 0 : index
    %214 = memref.load %arg2[%c3_112, %c0_113] : memref<8x4xf32, #tpu.memory_space<smem>>
    %215 = vector.broadcast %214 : f32 to vector<16x32xf32>
    %216 = arith.mulf %6, %215 : vector<16x32xf32>
    %c3_114 = arith.constant 3 : index
    %c1_115 = arith.constant 1 : index
    %217 = memref.load %arg2[%c3_114, %c1_115] : memref<8x4xf32, #tpu.memory_space<smem>>
    %218 = vector.broadcast %217 : f32 to vector<16x32xf32>
    %219 = arith.mulf %8, %218 : vector<16x32xf32>
    %220 = arith.addf %216, %219 : vector<16x32xf32>
    %c3_116 = arith.constant 3 : index
    %c2_117 = arith.constant 2 : index
    %221 = memref.load %arg2[%c3_116, %c2_117] : memref<8x4xf32, #tpu.memory_space<smem>>
    %222 = vector.broadcast %221 : f32 to vector<16x32xf32>
    %223 = arith.mulf %10, %222 : vector<16x32xf32>
    %224 = arith.addf %220, %223 : vector<16x32xf32>
    %c3_118 = arith.constant 3 : index
    %c3_119 = arith.constant 3 : index
    %225 = memref.load %arg2[%c3_118, %c3_119] : memref<8x4xf32, #tpu.memory_space<smem>>
    %226 = vector.broadcast %225 : f32 to vector<16x32xf32>
    %227 = arith.mulf %12, %226 : vector<16x32xf32>
    %228 = arith.addf %224, %227 : vector<16x32xf32>
    %c3_120 = arith.constant 3 : index
    %229 = memref.load %arg3[%c3_120] : memref<8xf32, #tpu.memory_space<smem>>
    %230 = vector.broadcast %229 : f32 to vector<16x32xf32>
    %231 = arith.mulf %228, %230 : vector<16x32xf32>
    %c3_121 = arith.constant 3 : index
    %232 = memref.load %arg4[%c3_121] : memref<8xf32, #tpu.memory_space<smem>>
    %233 = vector.broadcast %232 : f32 to vector<16x32xf32>
    %234 = arith.addf %231, %233 : vector<16x32xf32>
    %cst_122 = arith.constant 0.000000e+00 : f32
    %235 = vector.broadcast %cst_122 : f32 to vector<16x32xf32>
    %236 = arith.maximumf %234, %235 : vector<16x32xf32>
    %c3_123 = arith.constant 3 : index
    %c0_124 = arith.constant 0 : index
    %c0_125 = arith.constant 0 : index
    %237 = vector.load %arg10[%c3_123, %c0_124, %c0_125] : memref<8x16x32xf32, #tpu.memory_space<vmem>>, vector<1x16x32xf32>
    %238 = vector.shape_cast %237 : vector<1x16x32xf32> to vector<16x32xf32>
    %239 = vector.shape_cast %236 : vector<16x32xf32> to vector<1x16x32xf32>
    tpu.vector_store %arg10[%c3_123, %c0_124, %c0_125], %239 {strides = array<i32>} : memref<8x16x32xf32, #tpu.memory_space<vmem>>, vector<1x16x32xf32>,
    %c2_126 = arith.constant 2 : index
    %c3_127 = arith.constant 3 : index
    %240 = memref.load %arg5[%c2_126, %c3_127] : memref<3x8xf32, #tpu.memory_space<smem>>
    %241 = vector.broadcast %240 : f32 to vector<16x32xf32>
    %242 = arith.mulf %236, %241 : vector<16x32xf32>
    %c4_i32_128 = arith.constant 4 : i32
    %243 = tpu.dynamic_rotate %236 by %c4_i32_128 dim 0 : vector<16x32xf32>, i32 -> vector<16x32xf32>
    %cst_129 = arith.constant 0.000000e+00 : f32
    %244 = vector.broadcast %cst_129 : f32 to vector<16x32xf32>
    %245 = arith.select %2, %243, %244 : vector<16x32xi1>, vector<16x32xf32>
    %c0_130 = arith.constant 0 : index
    %c3_131 = arith.constant 3 : index
    %246 = memref.load %arg5[%c0_130, %c3_131] : memref<3x8xf32, #tpu.memory_space<smem>>
    %247 = vector.broadcast %246 : f32 to vector<16x32xf32>
    %248 = arith.mulf %245, %247 : vector<16x32xf32>
    %249 = arith.addf %242, %248 : vector<16x32xf32>
    %c2_i32_132 = arith.constant 2 : i32
    %250 = tpu.dynamic_rotate %236 by %c2_i32_132 dim 0 : vector<16x32xf32>, i32 -> vector<16x32xf32>
    %cst_133 = arith.constant 0.000000e+00 : f32
    %251 = vector.broadcast %cst_133 : f32 to vector<16x32xf32>
    %252 = arith.select %4, %250, %251 : vector<16x32xi1>, vector<16x32xf32>
    %c1_134 = arith.constant 1 : index
    %c3_135 = arith.constant 3 : index
    %253 = memref.load %arg5[%c1_134, %c3_135] : memref<3x8xf32, #tpu.memory_space<smem>>
    %254 = vector.broadcast %253 : f32 to vector<16x32xf32>
    %255 = arith.mulf %252, %254 : vector<16x32xf32>
    %256 = arith.addf %249, %255 : vector<16x32xf32>
    %c3_136 = arith.constant 3 : index
    %257 = memref.load %arg6[%c3_136] : memref<8xf32, #tpu.memory_space<smem>>
    %258 = vector.broadcast %257 : f32 to vector<16x32xf32>
    %259 = arith.mulf %256, %258 : vector<16x32xf32>
    %c3_137 = arith.constant 3 : index
    %260 = memref.load %arg7[%c3_137] : memref<8xf32, #tpu.memory_space<smem>>
    %261 = vector.broadcast %260 : f32 to vector<16x32xf32>
    %262 = arith.addf %259, %261 : vector<16x32xf32>
    %cst_138 = arith.constant 0.000000e+00 : f32
    %263 = vector.broadcast %cst_138 : f32 to vector<16x32xf32>
    %264 = arith.maximumf %262, %263 : vector<16x32xf32>
    %c0_139 = arith.constant 0 : index
    %c3_140 = arith.constant 3 : index
    %265 = memref.load %arg8[%c0_139, %c3_140] : memref<4x8xf32, #tpu.memory_space<smem>>
    %266 = vector.broadcast %265 : f32 to vector<16x32xf32>
    %267 = arith.mulf %264, %266 : vector<16x32xf32>
    %268 = arith.addf %201, %267 : vector<16x32xf32>
    %c1_141 = arith.constant 1 : index
    %c3_142 = arith.constant 3 : index
    %269 = memref.load %arg8[%c1_141, %c3_142] : memref<4x8xf32, #tpu.memory_space<smem>>
    %270 = vector.broadcast %269 : f32 to vector<16x32xf32>
    %271 = arith.mulf %264, %270 : vector<16x32xf32>
    %272 = arith.addf %205, %271 : vector<16x32xf32>
    %c2_143 = arith.constant 2 : index
    %c3_144 = arith.constant 3 : index
    %273 = memref.load %arg8[%c2_143, %c3_144] : memref<4x8xf32, #tpu.memory_space<smem>>
    %274 = vector.broadcast %273 : f32 to vector<16x32xf32>
    %275 = arith.mulf %264, %274 : vector<16x32xf32>
    %276 = arith.addf %209, %275 : vector<16x32xf32>
    %c3_145 = arith.constant 3 : index
    %c3_146 = arith.constant 3 : index
    %277 = memref.load %arg8[%c3_145, %c3_146] : memref<4x8xf32, #tpu.memory_space<smem>>
    %278 = vector.broadcast %277 : f32 to vector<16x32xf32>
    %279 = arith.mulf %264, %278 : vector<16x32xf32>
    %280 = arith.addf %213, %279 : vector<16x32xf32>
    %c4 = arith.constant 4 : index
    %c0_147 = arith.constant 0 : index
    %281 = memref.load %arg2[%c4, %c0_147] : memref<8x4xf32, #tpu.memory_space<smem>>
    %282 = vector.broadcast %281 : f32 to vector<16x32xf32>
    %283 = arith.mulf %6, %282 : vector<16x32xf32>
    %c4_148 = arith.constant 4 : index
    %c1_149 = arith.constant 1 : index
    %284 = memref.load %arg2[%c4_148, %c1_149] : memref<8x4xf32, #tpu.memory_space<smem>>
    %285 = vector.broadcast %284 : f32 to vector<16x32xf32>
    %286 = arith.mulf %8, %285 : vector<16x32xf32>
    %287 = arith.addf %283, %286 : vector<16x32xf32>
    %c4_150 = arith.constant 4 : index
    %c2_151 = arith.constant 2 : index
    %288 = memref.load %arg2[%c4_150, %c2_151] : memref<8x4xf32, #tpu.memory_space<smem>>
    %289 = vector.broadcast %288 : f32 to vector<16x32xf32>
    %290 = arith.mulf %10, %289 : vector<16x32xf32>
    %291 = arith.addf %287, %290 : vector<16x32xf32>
    %c4_152 = arith.constant 4 : index
    %c3_153 = arith.constant 3 : index
    %292 = memref.load %arg2[%c4_152, %c3_153] : memref<8x4xf32, #tpu.memory_space<smem>>
    %293 = vector.broadcast %292 : f32 to vector<16x32xf32>
    %294 = arith.mulf %12, %293 : vector<16x32xf32>
    %295 = arith.addf %291, %294 : vector<16x32xf32>
    %c4_154 = arith.constant 4 : index
    %296 = memref.load %arg3[%c4_154] : memref<8xf32, #tpu.memory_space<smem>>
    %297 = vector.broadcast %296 : f32 to vector<16x32xf32>
    %298 = arith.mulf %295, %297 : vector<16x32xf32>
    %c4_155 = arith.constant 4 : index
    %299 = memref.load %arg4[%c4_155] : memref<8xf32, #tpu.memory_space<smem>>
    %300 = vector.broadcast %299 : f32 to vector<16x32xf32>
    %301 = arith.addf %298, %300 : vector<16x32xf32>
    %cst_156 = arith.constant 0.000000e+00 : f32
    %302 = vector.broadcast %cst_156 : f32 to vector<16x32xf32>
    %303 = arith.maximumf %301, %302 : vector<16x32xf32>
    %c4_157 = arith.constant 4 : index
    %c0_158 = arith.constant 0 : index
    %c0_159 = arith.constant 0 : index
    %304 = vector.load %arg10[%c4_157, %c0_158, %c0_159] : memref<8x16x32xf32, #tpu.memory_space<vmem>>, vector<1x16x32xf32>
    %305 = vector.shape_cast %304 : vector<1x16x32xf32> to vector<16x32xf32>
    %306 = vector.shape_cast %303 : vector<16x32xf32> to vector<1x16x32xf32>
    tpu.vector_store %arg10[%c4_157, %c0_158, %c0_159], %306 {strides = array<i32>} : memref<8x16x32xf32, #tpu.memory_space<vmem>>, vector<1x16x32xf32>,
    %c2_160 = arith.constant 2 : index
    %c4_161 = arith.constant 4 : index
    %307 = memref.load %arg5[%c2_160, %c4_161] : memref<3x8xf32, #tpu.memory_space<smem>>
    %308 = vector.broadcast %307 : f32 to vector<16x32xf32>
    %309 = arith.mulf %303, %308 : vector<16x32xf32>
    %c4_i32_162 = arith.constant 4 : i32
    %310 = tpu.dynamic_rotate %303 by %c4_i32_162 dim 0 : vector<16x32xf32>, i32 -> vector<16x32xf32>
    %cst_163 = arith.constant 0.000000e+00 : f32
    %311 = vector.broadcast %cst_163 : f32 to vector<16x32xf32>
    %312 = arith.select %2, %310, %311 : vector<16x32xi1>, vector<16x32xf32>
    %c0_164 = arith.constant 0 : index
    %c4_165 = arith.constant 4 : index
    %313 = memref.load %arg5[%c0_164, %c4_165] : memref<3x8xf32, #tpu.memory_space<smem>>
    %314 = vector.broadcast %313 : f32 to vector<16x32xf32>
    %315 = arith.mulf %312, %314 : vector<16x32xf32>
    %316 = arith.addf %309, %315 : vector<16x32xf32>
    %c2_i32_166 = arith.constant 2 : i32
    %317 = tpu.dynamic_rotate %303 by %c2_i32_166 dim 0 : vector<16x32xf32>, i32 -> vector<16x32xf32>
    %cst_167 = arith.constant 0.000000e+00 : f32
    %318 = vector.broadcast %cst_167 : f32 to vector<16x32xf32>
    %319 = arith.select %4, %317, %318 : vector<16x32xi1>, vector<16x32xf32>
    %c1_168 = arith.constant 1 : index
    %c4_169 = arith.constant 4 : index
    %320 = memref.load %arg5[%c1_168, %c4_169] : memref<3x8xf32, #tpu.memory_space<smem>>
    %321 = vector.broadcast %320 : f32 to vector<16x32xf32>
    %322 = arith.mulf %319, %321 : vector<16x32xf32>
    %323 = arith.addf %316, %322 : vector<16x32xf32>
    %c4_170 = arith.constant 4 : index
    %324 = memref.load %arg6[%c4_170] : memref<8xf32, #tpu.memory_space<smem>>
    %325 = vector.broadcast %324 : f32 to vector<16x32xf32>
    %326 = arith.mulf %323, %325 : vector<16x32xf32>
    %c4_171 = arith.constant 4 : index
    %327 = memref.load %arg7[%c4_171] : memref<8xf32, #tpu.memory_space<smem>>
    %328 = vector.broadcast %327 : f32 to vector<16x32xf32>
    %329 = arith.addf %326, %328 : vector<16x32xf32>
    %cst_172 = arith.constant 0.000000e+00 : f32
    %330 = vector.broadcast %cst_172 : f32 to vector<16x32xf32>
    %331 = arith.maximumf %329, %330 : vector<16x32xf32>
    %c0_173 = arith.constant 0 : index
    %c4_174 = arith.constant 4 : index
    %332 = memref.load %arg8[%c0_173, %c4_174] : memref<4x8xf32, #tpu.memory_space<smem>>
    %333 = vector.broadcast %332 : f32 to vector<16x32xf32>
    %334 = arith.mulf %331, %333 : vector<16x32xf32>
    %335 = arith.addf %268, %334 : vector<16x32xf32>
    %c1_175 = arith.constant 1 : index
    %c4_176 = arith.constant 4 : index
    %336 = memref.load %arg8[%c1_175, %c4_176] : memref<4x8xf32, #tpu.memory_space<smem>>
    %337 = vector.broadcast %336 : f32 to vector<16x32xf32>
    %338 = arith.mulf %331, %337 : vector<16x32xf32>
    %339 = arith.addf %272, %338 : vector<16x32xf32>
    %c2_177 = arith.constant 2 : index
    %c4_178 = arith.constant 4 : index
    %340 = memref.load %arg8[%c2_177, %c4_178] : memref<4x8xf32, #tpu.memory_space<smem>>
    %341 = vector.broadcast %340 : f32 to vector<16x32xf32>
    %342 = arith.mulf %331, %341 : vector<16x32xf32>
    %343 = arith.addf %276, %342 : vector<16x32xf32>
    %c3_179 = arith.constant 3 : index
    %c4_180 = arith.constant 4 : index
    %344 = memref.load %arg8[%c3_179, %c4_180] : memref<4x8xf32, #tpu.memory_space<smem>>
    %345 = vector.broadcast %344 : f32 to vector<16x32xf32>
    %346 = arith.mulf %331, %345 : vector<16x32xf32>
    %347 = arith.addf %280, %346 : vector<16x32xf32>
    %c5 = arith.constant 5 : index
    %c0_181 = arith.constant 0 : index
    %348 = memref.load %arg2[%c5, %c0_181] : memref<8x4xf32, #tpu.memory_space<smem>>
    %349 = vector.broadcast %348 : f32 to vector<16x32xf32>
    %350 = arith.mulf %6, %349 : vector<16x32xf32>
    %c5_182 = arith.constant 5 : index
    %c1_183 = arith.constant 1 : index
    %351 = memref.load %arg2[%c5_182, %c1_183] : memref<8x4xf32, #tpu.memory_space<smem>>
    %352 = vector.broadcast %351 : f32 to vector<16x32xf32>
    %353 = arith.mulf %8, %352 : vector<16x32xf32>
    %354 = arith.addf %350, %353 : vector<16x32xf32>
    %c5_184 = arith.constant 5 : index
    %c2_185 = arith.constant 2 : index
    %355 = memref.load %arg2[%c5_184, %c2_185] : memref<8x4xf32, #tpu.memory_space<smem>>
    %356 = vector.broadcast %355 : f32 to vector<16x32xf32>
    %357 = arith.mulf %10, %356 : vector<16x32xf32>
    %358 = arith.addf %354, %357 : vector<16x32xf32>
    %c5_186 = arith.constant 5 : index
    %c3_187 = arith.constant 3 : index
    %359 = memref.load %arg2[%c5_186, %c3_187] : memref<8x4xf32, #tpu.memory_space<smem>>
    %360 = vector.broadcast %359 : f32 to vector<16x32xf32>
    %361 = arith.mulf %12, %360 : vector<16x32xf32>
    %362 = arith.addf %358, %361 : vector<16x32xf32>
    %c5_188 = arith.constant 5 : index
    %363 = memref.load %arg3[%c5_188] : memref<8xf32, #tpu.memory_space<smem>>
    %364 = vector.broadcast %363 : f32 to vector<16x32xf32>
    %365 = arith.mulf %362, %364 : vector<16x32xf32>
    %c5_189 = arith.constant 5 : index
    %366 = memref.load %arg4[%c5_189] : memref<8xf32, #tpu.memory_space<smem>>
    %367 = vector.broadcast %366 : f32 to vector<16x32xf32>
    %368 = arith.addf %365, %367 : vector<16x32xf32>
    %cst_190 = arith.constant 0.000000e+00 : f32
    %369 = vector.broadcast %cst_190 : f32 to vector<16x32xf32>
    %370 = arith.maximumf %368, %369 : vector<16x32xf32>
    %c5_191 = arith.constant 5 : index
    %c0_192 = arith.constant 0 : index
    %c0_193 = arith.constant 0 : index
    %371 = vector.load %arg10[%c5_191, %c0_192, %c0_193] : memref<8x16x32xf32, #tpu.memory_space<vmem>>, vector<1x16x32xf32>
    %372 = vector.shape_cast %371 : vector<1x16x32xf32> to vector<16x32xf32>
    %373 = vector.shape_cast %370 : vector<16x32xf32> to vector<1x16x32xf32>
    tpu.vector_store %arg10[%c5_191, %c0_192, %c0_193], %373 {strides = array<i32>} : memref<8x16x32xf32, #tpu.memory_space<vmem>>, vector<1x16x32xf32>,
    %c2_194 = arith.constant 2 : index
    %c5_195 = arith.constant 5 : index
    %374 = memref.load %arg5[%c2_194, %c5_195] : memref<3x8xf32, #tpu.memory_space<smem>>
    %375 = vector.broadcast %374 : f32 to vector<16x32xf32>
    %376 = arith.mulf %370, %375 : vector<16x32xf32>
    %c4_i32_196 = arith.constant 4 : i32
    %377 = tpu.dynamic_rotate %370 by %c4_i32_196 dim 0 : vector<16x32xf32>, i32 -> vector<16x32xf32>
    %cst_197 = arith.constant 0.000000e+00 : f32
    %378 = vector.broadcast %cst_197 : f32 to vector<16x32xf32>
    %379 = arith.select %2, %377, %378 : vector<16x32xi1>, vector<16x32xf32>
    %c0_198 = arith.constant 0 : index
    %c5_199 = arith.constant 5 : index
    %380 = memref.load %arg5[%c0_198, %c5_199] : memref<3x8xf32, #tpu.memory_space<smem>>
    %381 = vector.broadcast %380 : f32 to vector<16x32xf32>
    %382 = arith.mulf %379, %381 : vector<16x32xf32>
    %383 = arith.addf %376, %382 : vector<16x32xf32>
    %c2_i32_200 = arith.constant 2 : i32
    %384 = tpu.dynamic_rotate %370 by %c2_i32_200 dim 0 : vector<16x32xf32>, i32 -> vector<16x32xf32>
    %cst_201 = arith.constant 0.000000e+00 : f32
    %385 = vector.broadcast %cst_201 : f32 to vector<16x32xf32>
    %386 = arith.select %4, %384, %385 : vector<16x32xi1>, vector<16x32xf32>
    %c1_202 = arith.constant 1 : index
    %c5_203 = arith.constant 5 : index
    %387 = memref.load %arg5[%c1_202, %c5_203] : memref<3x8xf32, #tpu.memory_space<smem>>
    %388 = vector.broadcast %387 : f32 to vector<16x32xf32>
    %389 = arith.mulf %386, %388 : vector<16x32xf32>
    %390 = arith.addf %383, %389 : vector<16x32xf32>
    %c5_204 = arith.constant 5 : index
    %391 = memref.load %arg6[%c5_204] : memref<8xf32, #tpu.memory_space<smem>>
    %392 = vector.broadcast %391 : f32 to vector<16x32xf32>
    %393 = arith.mulf %390, %392 : vector<16x32xf32>
    %c5_205 = arith.constant 5 : index
    %394 = memref.load %arg7[%c5_205] : memref<8xf32, #tpu.memory_space<smem>>
    %395 = vector.broadcast %394 : f32 to vector<16x32xf32>
    %396 = arith.addf %393, %395 : vector<16x32xf32>
    %cst_206 = arith.constant 0.000000e+00 : f32
    %397 = vector.broadcast %cst_206 : f32 to vector<16x32xf32>
    %398 = arith.maximumf %396, %397 : vector<16x32xf32>
    %c0_207 = arith.constant 0 : index
    %c5_208 = arith.constant 5 : index
    %399 = memref.load %arg8[%c0_207, %c5_208] : memref<4x8xf32, #tpu.memory_space<smem>>
    %400 = vector.broadcast %399 : f32 to vector<16x32xf32>
    %401 = arith.mulf %398, %400 : vector<16x32xf32>
    %402 = arith.addf %335, %401 : vector<16x32xf32>
    %c1_209 = arith.constant 1 : index
    %c5_210 = arith.constant 5 : index
    %403 = memref.load %arg8[%c1_209, %c5_210] : memref<4x8xf32, #tpu.memory_space<smem>>
    %404 = vector.broadcast %403 : f32 to vector<16x32xf32>
    %405 = arith.mulf %398, %404 : vector<16x32xf32>
    %406 = arith.addf %339, %405 : vector<16x32xf32>
    %c2_211 = arith.constant 2 : index
    %c5_212 = arith.constant 5 : index
    %407 = memref.load %arg8[%c2_211, %c5_212] : memref<4x8xf32, #tpu.memory_space<smem>>
    %408 = vector.broadcast %407 : f32 to vector<16x32xf32>
    %409 = arith.mulf %398, %408 : vector<16x32xf32>
    %410 = arith.addf %343, %409 : vector<16x32xf32>
    %c3_213 = arith.constant 3 : index
    %c5_214 = arith.constant 5 : index
    %411 = memref.load %arg8[%c3_213, %c5_214] : memref<4x8xf32, #tpu.memory_space<smem>>
    %412 = vector.broadcast %411 : f32 to vector<16x32xf32>
    %413 = arith.mulf %398, %412 : vector<16x32xf32>
    %414 = arith.addf %347, %413 : vector<16x32xf32>
    %c6 = arith.constant 6 : index
    %c0_215 = arith.constant 0 : index
    %415 = memref.load %arg2[%c6, %c0_215] : memref<8x4xf32, #tpu.memory_space<smem>>
    %416 = vector.broadcast %415 : f32 to vector<16x32xf32>
    %417 = arith.mulf %6, %416 : vector<16x32xf32>
    %c6_216 = arith.constant 6 : index
    %c1_217 = arith.constant 1 : index
    %418 = memref.load %arg2[%c6_216, %c1_217] : memref<8x4xf32, #tpu.memory_space<smem>>
    %419 = vector.broadcast %418 : f32 to vector<16x32xf32>
    %420 = arith.mulf %8, %419 : vector<16x32xf32>
    %421 = arith.addf %417, %420 : vector<16x32xf32>
    %c6_218 = arith.constant 6 : index
    %c2_219 = arith.constant 2 : index
    %422 = memref.load %arg2[%c6_218, %c2_219] : memref<8x4xf32, #tpu.memory_space<smem>>
    %423 = vector.broadcast %422 : f32 to vector<16x32xf32>
    %424 = arith.mulf %10, %423 : vector<16x32xf32>
    %425 = arith.addf %421, %424 : vector<16x32xf32>
    %c6_220 = arith.constant 6 : index
    %c3_221 = arith.constant 3 : index
    %426 = memref.load %arg2[%c6_220, %c3_221] : memref<8x4xf32, #tpu.memory_space<smem>>
    %427 = vector.broadcast %426 : f32 to vector<16x32xf32>
    %428 = arith.mulf %12, %427 : vector<16x32xf32>
    %429 = arith.addf %425, %428 : vector<16x32xf32>
    %c6_222 = arith.constant 6 : index
    %430 = memref.load %arg3[%c6_222] : memref<8xf32, #tpu.memory_space<smem>>
    %431 = vector.broadcast %430 : f32 to vector<16x32xf32>
    %432 = arith.mulf %429, %431 : vector<16x32xf32>
    %c6_223 = arith.constant 6 : index
    %433 = memref.load %arg4[%c6_223] : memref<8xf32, #tpu.memory_space<smem>>
    %434 = vector.broadcast %433 : f32 to vector<16x32xf32>
    %435 = arith.addf %432, %434 : vector<16x32xf32>
    %cst_224 = arith.constant 0.000000e+00 : f32
    %436 = vector.broadcast %cst_224 : f32 to vector<16x32xf32>
    %437 = arith.maximumf %435, %436 : vector<16x32xf32>
    %c6_225 = arith.constant 6 : index
    %c0_226 = arith.constant 0 : index
    %c0_227 = arith.constant 0 : index
    %438 = vector.load %arg10[%c6_225, %c0_226, %c0_227] : memref<8x16x32xf32, #tpu.memory_space<vmem>>, vector<1x16x32xf32>
    %439 = vector.shape_cast %438 : vector<1x16x32xf32> to vector<16x32xf32>
    %440 = vector.shape_cast %437 : vector<16x32xf32> to vector<1x16x32xf32>
    tpu.vector_store %arg10[%c6_225, %c0_226, %c0_227], %440 {strides = array<i32>} : memref<8x16x32xf32, #tpu.memory_space<vmem>>, vector<1x16x32xf32>,
    %c2_228 = arith.constant 2 : index
    %c6_229 = arith.constant 6 : index
    %441 = memref.load %arg5[%c2_228, %c6_229] : memref<3x8xf32, #tpu.memory_space<smem>>
    %442 = vector.broadcast %441 : f32 to vector<16x32xf32>
    %443 = arith.mulf %437, %442 : vector<16x32xf32>
    %c4_i32_230 = arith.constant 4 : i32
    %444 = tpu.dynamic_rotate %437 by %c4_i32_230 dim 0 : vector<16x32xf32>, i32 -> vector<16x32xf32>
    %cst_231 = arith.constant 0.000000e+00 : f32
    %445 = vector.broadcast %cst_231 : f32 to vector<16x32xf32>
    %446 = arith.select %2, %444, %445 : vector<16x32xi1>, vector<16x32xf32>
    %c0_232 = arith.constant 0 : index
    %c6_233 = arith.constant 6 : index
    %447 = memref.load %arg5[%c0_232, %c6_233] : memref<3x8xf32, #tpu.memory_space<smem>>
    %448 = vector.broadcast %447 : f32 to vector<16x32xf32>
    %449 = arith.mulf %446, %448 : vector<16x32xf32>
    %450 = arith.addf %443, %449 : vector<16x32xf32>
    %c2_i32_234 = arith.constant 2 : i32
    %451 = tpu.dynamic_rotate %437 by %c2_i32_234 dim 0 : vector<16x32xf32>, i32 -> vector<16x32xf32>
    %cst_235 = arith.constant 0.000000e+00 : f32
    %452 = vector.broadcast %cst_235 : f32 to vector<16x32xf32>
    %453 = arith.select %4, %451, %452 : vector<16x32xi1>, vector<16x32xf32>
    %c1_236 = arith.constant 1 : index
    %c6_237 = arith.constant 6 : index
    %454 = memref.load %arg5[%c1_236, %c6_237] : memref<3x8xf32, #tpu.memory_space<smem>>
    %455 = vector.broadcast %454 : f32 to vector<16x32xf32>
    %456 = arith.mulf %453, %455 : vector<16x32xf32>
    %457 = arith.addf %450, %456 : vector<16x32xf32>
    %c6_238 = arith.constant 6 : index
    %458 = memref.load %arg6[%c6_238] : memref<8xf32, #tpu.memory_space<smem>>
    %459 = vector.broadcast %458 : f32 to vector<16x32xf32>
    %460 = arith.mulf %457, %459 : vector<16x32xf32>
    %c6_239 = arith.constant 6 : index
    %461 = memref.load %arg7[%c6_239] : memref<8xf32, #tpu.memory_space<smem>>
    %462 = vector.broadcast %461 : f32 to vector<16x32xf32>
    %463 = arith.addf %460, %462 : vector<16x32xf32>
    %cst_240 = arith.constant 0.000000e+00 : f32
    %464 = vector.broadcast %cst_240 : f32 to vector<16x32xf32>
    %465 = arith.maximumf %463, %464 : vector<16x32xf32>
    %c0_241 = arith.constant 0 : index
    %c6_242 = arith.constant 6 : index
    %466 = memref.load %arg8[%c0_241, %c6_242] : memref<4x8xf32, #tpu.memory_space<smem>>
    %467 = vector.broadcast %466 : f32 to vector<16x32xf32>
    %468 = arith.mulf %465, %467 : vector<16x32xf32>
    %469 = arith.addf %402, %468 : vector<16x32xf32>
    %c1_243 = arith.constant 1 : index
    %c6_244 = arith.constant 6 : index
    %470 = memref.load %arg8[%c1_243, %c6_244] : memref<4x8xf32, #tpu.memory_space<smem>>
    %471 = vector.broadcast %470 : f32 to vector<16x32xf32>
    %472 = arith.mulf %465, %471 : vector<16x32xf32>
    %473 = arith.addf %406, %472 : vector<16x32xf32>
    %c2_245 = arith.constant 2 : index
    %c6_246 = arith.constant 6 : index
    %474 = memref.load %arg8[%c2_245, %c6_246] : memref<4x8xf32, #tpu.memory_space<smem>>
    %475 = vector.broadcast %474 : f32 to vector<16x32xf32>
    %476 = arith.mulf %465, %475 : vector<16x32xf32>
    %477 = arith.addf %410, %476 : vector<16x32xf32>
    %c3_247 = arith.constant 3 : index
    %c6_248 = arith.constant 6 : index
    %478 = memref.load %arg8[%c3_247, %c6_248] : memref<4x8xf32, #tpu.memory_space<smem>>
    %479 = vector.broadcast %478 : f32 to vector<16x32xf32>
    %480 = arith.mulf %465, %479 : vector<16x32xf32>
    %481 = arith.addf %414, %480 : vector<16x32xf32>
    %c7 = arith.constant 7 : index
    %c0_249 = arith.constant 0 : index
    %482 = memref.load %arg2[%c7, %c0_249] : memref<8x4xf32, #tpu.memory_space<smem>>
    %483 = vector.broadcast %482 : f32 to vector<16x32xf32>
    %484 = arith.mulf %6, %483 : vector<16x32xf32>
    %c7_250 = arith.constant 7 : index
    %c1_251 = arith.constant 1 : index
    %485 = memref.load %arg2[%c7_250, %c1_251] : memref<8x4xf32, #tpu.memory_space<smem>>
    %486 = vector.broadcast %485 : f32 to vector<16x32xf32>
    %487 = arith.mulf %8, %486 : vector<16x32xf32>
    %488 = arith.addf %484, %487 : vector<16x32xf32>
    %c7_252 = arith.constant 7 : index
    %c2_253 = arith.constant 2 : index
    %489 = memref.load %arg2[%c7_252, %c2_253] : memref<8x4xf32, #tpu.memory_space<smem>>
    %490 = vector.broadcast %489 : f32 to vector<16x32xf32>
    %491 = arith.mulf %10, %490 : vector<16x32xf32>
    %492 = arith.addf %488, %491 : vector<16x32xf32>
    %c7_254 = arith.constant 7 : index
    %c3_255 = arith.constant 3 : index
    %493 = memref.load %arg2[%c7_254, %c3_255] : memref<8x4xf32, #tpu.memory_space<smem>>
    %494 = vector.broadcast %493 : f32 to vector<16x32xf32>
    %495 = arith.mulf %12, %494 : vector<16x32xf32>
    %496 = arith.addf %492, %495 : vector<16x32xf32>
    %c7_256 = arith.constant 7 : index
    %497 = memref.load %arg3[%c7_256] : memref<8xf32, #tpu.memory_space<smem>>
    %498 = vector.broadcast %497 : f32 to vector<16x32xf32>
    %499 = arith.mulf %496, %498 : vector<16x32xf32>
    %c7_257 = arith.constant 7 : index
    %500 = memref.load %arg4[%c7_257] : memref<8xf32, #tpu.memory_space<smem>>
    %501 = vector.broadcast %500 : f32 to vector<16x32xf32>
    %502 = arith.addf %499, %501 : vector<16x32xf32>
    %cst_258 = arith.constant 0.000000e+00 : f32
    %503 = vector.broadcast %cst_258 : f32 to vector<16x32xf32>
    %504 = arith.maximumf %502, %503 : vector<16x32xf32>
    %c7_259 = arith.constant 7 : index
    %c0_260 = arith.constant 0 : index
    %c0_261 = arith.constant 0 : index
    %505 = vector.load %arg10[%c7_259, %c0_260, %c0_261] : memref<8x16x32xf32, #tpu.memory_space<vmem>>, vector<1x16x32xf32>
    %506 = vector.shape_cast %505 : vector<1x16x32xf32> to vector<16x32xf32>
    %507 = vector.shape_cast %504 : vector<16x32xf32> to vector<1x16x32xf32>
    tpu.vector_store %arg10[%c7_259, %c0_260, %c0_261], %507 {strides = array<i32>} : memref<8x16x32xf32, #tpu.memory_space<vmem>>, vector<1x16x32xf32>,
    %c2_262 = arith.constant 2 : index
    %c7_263 = arith.constant 7 : index
    %508 = memref.load %arg5[%c2_262, %c7_263] : memref<3x8xf32, #tpu.memory_space<smem>>
    %509 = vector.broadcast %508 : f32 to vector<16x32xf32>
    %510 = arith.mulf %504, %509 : vector<16x32xf32>
    %c4_i32_264 = arith.constant 4 : i32
    %511 = tpu.dynamic_rotate %504 by %c4_i32_264 dim 0 : vector<16x32xf32>, i32 -> vector<16x32xf32>
    %cst_265 = arith.constant 0.000000e+00 : f32
    %512 = vector.broadcast %cst_265 : f32 to vector<16x32xf32>
    %513 = arith.select %2, %511, %512 : vector<16x32xi1>, vector<16x32xf32>
    %c0_266 = arith.constant 0 : index
    %c7_267 = arith.constant 7 : index
    %514 = memref.load %arg5[%c0_266, %c7_267] : memref<3x8xf32, #tpu.memory_space<smem>>
    %515 = vector.broadcast %514 : f32 to vector<16x32xf32>
    %516 = arith.mulf %513, %515 : vector<16x32xf32>
    %517 = arith.addf %510, %516 : vector<16x32xf32>
    %c2_i32_268 = arith.constant 2 : i32
    %518 = tpu.dynamic_rotate %504 by %c2_i32_268 dim 0 : vector<16x32xf32>, i32 -> vector<16x32xf32>
    %cst_269 = arith.constant 0.000000e+00 : f32
    %519 = vector.broadcast %cst_269 : f32 to vector<16x32xf32>
    %520 = arith.select %4, %518, %519 : vector<16x32xi1>, vector<16x32xf32>
    %c1_270 = arith.constant 1 : index
    %c7_271 = arith.constant 7 : index
    %521 = memref.load %arg5[%c1_270, %c7_271] : memref<3x8xf32, #tpu.memory_space<smem>>
    %522 = vector.broadcast %521 : f32 to vector<16x32xf32>
    %523 = arith.mulf %520, %522 : vector<16x32xf32>
    %524 = arith.addf %517, %523 : vector<16x32xf32>
    %c7_272 = arith.constant 7 : index
    %525 = memref.load %arg6[%c7_272] : memref<8xf32, #tpu.memory_space<smem>>
    %526 = vector.broadcast %525 : f32 to vector<16x32xf32>
    %527 = arith.mulf %524, %526 : vector<16x32xf32>
    %c7_273 = arith.constant 7 : index
    %528 = memref.load %arg7[%c7_273] : memref<8xf32, #tpu.memory_space<smem>>
    %529 = vector.broadcast %528 : f32 to vector<16x32xf32>
    %530 = arith.addf %527, %529 : vector<16x32xf32>
    %cst_274 = arith.constant 0.000000e+00 : f32
    %531 = vector.broadcast %cst_274 : f32 to vector<16x32xf32>
    %532 = arith.maximumf %530, %531 : vector<16x32xf32>
    %c0_275 = arith.constant 0 : index
    %c7_276 = arith.constant 7 : index
    %533 = memref.load %arg8[%c0_275, %c7_276] : memref<4x8xf32, #tpu.memory_space<smem>>
    %534 = vector.broadcast %533 : f32 to vector<16x32xf32>
    %535 = arith.mulf %532, %534 : vector<16x32xf32>
    %536 = arith.addf %469, %535 : vector<16x32xf32>
    %c1_277 = arith.constant 1 : index
    %c7_278 = arith.constant 7 : index
    %537 = memref.load %arg8[%c1_277, %c7_278] : memref<4x8xf32, #tpu.memory_space<smem>>
    %538 = vector.broadcast %537 : f32 to vector<16x32xf32>
    %539 = arith.mulf %532, %538 : vector<16x32xf32>
    %540 = arith.addf %473, %539 : vector<16x32xf32>
    %c2_279 = arith.constant 2 : index
    %c7_280 = arith.constant 7 : index
    %541 = memref.load %arg8[%c2_279, %c7_280] : memref<4x8xf32, #tpu.memory_space<smem>>
    %542 = vector.broadcast %541 : f32 to vector<16x32xf32>
    %543 = arith.mulf %532, %542 : vector<16x32xf32>
    %544 = arith.addf %477, %543 : vector<16x32xf32>
    %c3_281 = arith.constant 3 : index
    %c7_282 = arith.constant 7 : index
    %545 = memref.load %arg8[%c3_281, %c7_282] : memref<4x8xf32, #tpu.memory_space<smem>>
    %546 = vector.broadcast %545 : f32 to vector<16x32xf32>
    %547 = arith.mulf %532, %546 : vector<16x32xf32>
    %548 = arith.addf %481, %547 : vector<16x32xf32>
    %c0_283 = arith.constant 0 : index
    %c0_284 = arith.constant 0 : index
    %c0_285 = arith.constant 0 : index
    %549 = vector.load %arg9[%c0_283, %c0_284, %c0_285] : memref<4x16x32xf32, #tpu.memory_space<vmem>>, vector<1x16x32xf32>
    %550 = vector.shape_cast %549 : vector<1x16x32xf32> to vector<16x32xf32>
    %551 = vector.shape_cast %536 : vector<16x32xf32> to vector<1x16x32xf32>
    tpu.vector_store %arg9[%c0_283, %c0_284, %c0_285], %551 {strides = array<i32>} : memref<4x16x32xf32, #tpu.memory_space<vmem>>, vector<1x16x32xf32>,
    %c1_286 = arith.constant 1 : index
    %c0_287 = arith.constant 0 : index
    %c0_288 = arith.constant 0 : index
    %552 = vector.load %arg9[%c1_286, %c0_287, %c0_288] : memref<4x16x32xf32, #tpu.memory_space<vmem>>, vector<1x16x32xf32>
    %553 = vector.shape_cast %552 : vector<1x16x32xf32> to vector<16x32xf32>
    %554 = vector.shape_cast %540 : vector<16x32xf32> to vector<1x16x32xf32>
    tpu.vector_store %arg9[%c1_286, %c0_287, %c0_288], %554 {strides = array<i32>} : memref<4x16x32xf32, #tpu.memory_space<vmem>>, vector<1x16x32xf32>,
    %c2_289 = arith.constant 2 : index
    %c0_290 = arith.constant 0 : index
    %c0_291 = arith.constant 0 : index
    %555 = vector.load %arg9[%c2_289, %c0_290, %c0_291] : memref<4x16x32xf32, #tpu.memory_space<vmem>>, vector<1x16x32xf32>
    %556 = vector.shape_cast %555 : vector<1x16x32xf32> to vector<16x32xf32>
    %557 = vector.shape_cast %544 : vector<16x32xf32> to vector<1x16x32xf32>
    tpu.vector_store %arg9[%c2_289, %c0_290, %c0_291], %557 {strides = array<i32>} : memref<4x16x32xf32, #tpu.memory_space<vmem>>, vector<1x16x32xf32>,
    %c3_292 = arith.constant 3 : index
    %c0_293 = arith.constant 0 : index
    %c0_294 = arith.constant 0 : index
    %558 = vector.load %arg9[%c3_292, %c0_293, %c0_294] : memref<4x16x32xf32, #tpu.memory_space<vmem>>, vector<1x16x32xf32>
    %559 = vector.shape_cast %558 : vector<1x16x32xf32> to vector<16x32xf32>
    %560 = vector.shape_cast %548 : vector<16x32xf32> to vector<1x16x32xf32>
    tpu.vector_store %arg9[%c3_292, %c0_293, %c0_294], %560 {strides = array<i32>} : memref<4x16x32xf32, #tpu.memory_space<vmem>>, vector<1x16x32xf32>,
    return
  }
  func.func @transform_0(%arg0: i32) -> (i32, i32, i32) {
    %c0_i32 = arith.constant 0 : i32
    %c0_i32_0 = arith.constant 0 : i32
    %c0_i32_1 = arith.constant 0 : i32
    return %c0_i32, %c0_i32_0, %arg0 : i32, i32, i32
  }
  func.func @transform_1(%arg0: i32) -> (i32, i32) {
    %c0_i32 = arith.constant 0 : i32
    %c0_i32_0 = arith.constant 0 : i32
    %c0_i32_1 = arith.constant 0 : i32
    return %c0_i32, %c0_i32_0 : i32, i32
  }
  func.func @transform_2(%arg0: i32) -> i32 {
    %c0_i32 = arith.constant 0 : i32
    %c0_i32_0 = arith.constant 0 : i32
    return %c0_i32 : i32
  }
  func.func @transform_3(%arg0: i32) -> i32 {
    %c0_i32 = arith.constant 0 : i32
    %c0_i32_0 = arith.constant 0 : i32
    return %c0_i32 : i32
  }
  func.func @transform_4(%arg0: i32) -> (i32, i32) {
    %c0_i32 = arith.constant 0 : i32
    %c0_i32_0 = arith.constant 0 : i32
    %c0_i32_1 = arith.constant 0 : i32
    return %c0_i32, %c0_i32_0 : i32, i32
  }
  func.func @transform_5(%arg0: i32) -> i32 {
    %c0_i32 = arith.constant 0 : i32
    %c0_i32_0 = arith.constant 0 : i32
    return %c0_i32 : i32
  }
  func.func @transform_6(%arg0: i32) -> i32 {
    %c0_i32 = arith.constant 0 : i32
    %c0_i32_0 = arith.constant 0 : i32
    return %c0_i32 : i32
  }
  func.func @transform_7(%arg0: i32) -> (i32, i32) {
    %c0_i32 = arith.constant 0 : i32
    %c0_i32_0 = arith.constant 0 : i32
    %c0_i32_1 = arith.constant 0 : i32
    return %c0_i32, %c0_i32_0 : i32, i32
  }
  func.func @transform_8(%arg0: i32) -> (i32, i32, i32) {
    %c0_i32 = arith.constant 0 : i32
    %c0_i32_0 = arith.constant 0 : i32
    %c0_i32_1 = arith.constant 0 : i32
    return %c0_i32, %c0_i32_0, %arg0 : i32, i32, i32
  }
  func.func @transform_9(%arg0: i32) -> (i32, i32, i32) {
    %c0_i32 = arith.constant 0 : i32
    %c0_i32_0 = arith.constant 0 : i32
    %c0_i32_1 = arith.constant 0 : i32
    return %c0_i32, %c0_i32_0, %arg0 : i32, i32, i32
  }
}

</mosaic_0001>

<llo_original>
// kernel: tpu_custom_call.1
$region0: #{tpu_custom_call.1}
  #allocation0 [shape = 'u32[]', space=smem, size = 0x4, offset = 0x4, fixed_abs, tag = 'smem constant byte address 0x4 - core index']
  #allocation1 [shape = 'u32[72,128]{1,0:T(1,128)}', space=vmem, size = 0x9000, scoped, tag = 'internal scratch']
  %s0 = inlined_call_operand.hbm [shape: f32[4,16,32], index: 0, kind: input, shape index: {}]
  %s1 = inlined_call_operand.vmem [shape: f32[8,4], index: 1, kind: input, shape index: {}]
  %s2 = inlined_call_operand.vmem [shape: f32[8], index: 2, kind: input, shape index: {}]
  %s3 = inlined_call_operand.vmem [shape: f32[8], index: 3, kind: input, shape index: {}]
  %s4 = inlined_call_operand.vmem [shape: f32[3,8], index: 4, kind: input, shape index: {}]
  %s5 = inlined_call_operand.vmem [shape: f32[8], index: 5, kind: input, shape index: {}]
  %s6 = inlined_call_operand.vmem [shape: f32[8], index: 6, kind: input, shape index: {}]
  %s7 = inlined_call_operand.vmem [shape: f32[4,8], index: 7, kind: input, shape index: {}]
  %s8 = inlined_call_operand.hbm [shape: f32[4,16,32], index: 8, kind: output, shape index: {0}]
  %s9 = inlined_call_operand.hbm [shape: f32[8,16,32], index: 9, kind: output, shape index: {1}]
  %10 = xla_tuple %s8, %s9
  %s11 = sld [smem:[#allocation0]]
  $region82: #{tpu_custom_call.1} parent=0
    _
  %s13 = ssub.s32 1, %s11
  %s14 = scalar_select 0, %s13, %s11
  $region1: #{tpu_custom_call.1} parent=0
    #allocation2 [shape = 'u8[32768]{0}', space=vmem, size = 0x8000, scoped, tag = 'input window, operand 0, single buffered']
    #allocation3 [shape = 's32[1]{0}', space=sflag, size = 0x4, scoped, tag = 'scoped memory for tpu_custom_call.1']
    #allocation4 [shape = 's32[1]{0}', space=sflag, size = 0x4, scoped, tag = 'scoped memory for tpu_custom_call.1']
    #allocation5 [shape = 's32[1]{0}', space=sflag, size = 0x4, scoped, tag = 'scoped memory for tpu_custom_call.1']
    #allocation6 [shape = 'u8[4096]{0}', space=smem, size = 0x1000, scoped, tag = 'input window, operand 1, single buffered']
    #allocation7 [shape = 'u8[512]{0}', space=smem, size = 0x200, scoped, tag = 'input window, operand 2, single buffered']
    #allocation8 [shape = 's32[1]{0}', space=sflag, size = 0x4, scoped, tag = 'scoped memory for tpu_custom_call.1']
    #allocation9 [shape = 'u8[512]{0}', space=smem, size = 0x200, scoped, tag = 'input window, operand 3, single buffered']
    #allocation10 [shape = 'u8[2048]{0}', space=smem, size = 0x800, scoped, tag = 'input window, operand 4, single buffered']
    #allocation11 [shape = 's32[1]{0}', space=sflag, size = 0x4, scoped, tag = 'scoped memory for tpu_custom_call.1']
    #allocation12 [shape = 'u8[512]{0}', space=smem, size = 0x200, scoped, tag = 'input window, operand 5, single buffered']
    #allocation13 [shape = 'u8[512]{0}', space=smem, size = 0x200, scoped, tag = 'input window, operand 6, single buffered']
    #allocation14 [shape = 's32[1]{0}', space=sflag, size = 0x4, scoped, tag = 'scoped memory for tpu_custom_call.1']
    #allocation15 [shape = 'u8[2048]{0}', space=smem, size = 0x800, scoped, tag = 'input window, operand 7, single buffered']
    #allocation16 [shape = 'u8[32768]{0}', space=vmem, size = 0x8000, scoped, tag = 'output window, operand 0, single buffered']
    #allocation17 [shape = 'u8[65536]{0}', space=vmem, size = 0x10000, scoped, tag = 'output window, operand 1, single buffered']
    #allocation18 [shape = 's32[1]{0}', space=sflag, size = 0x4, scoped, tag = 'scoped memory for tpu_custom_call.1']
    %15 = vsyncpa [#allocation3], 0
    %16 = vsyncpa [#allocation5], 0
    %17 = vsyncpa [#allocation8], 0
    %18 = vsyncpa [#allocation11], 0
    %19 = vsyncpa [#allocation14], 0
    %20 = vsyncpa [#allocation4], 0
    %21 = vsyncpa [#allocation18], 0
    // Predicated region
    $region2: #{tpu_custom_call.1} parent=1 // pred_check
      _
    $region3: #{tpu_custom_call.1} parent=1 // pred_check_branch
      %23 = sbr.rel (0) target = $region5
    $region4: #{tpu_custom_call.1} parent=1 // pred_region
      %25 = vsyncadd [#allocation3], 0
      %s26 = sshll.u32 %s0, 4
      %s27 = int_to_ptr.hbm [resolvable:$true] %s26
      %s28 = sshll.u32 [#allocation2], 4
      %s29 = int_to_ptr.vmem [resolvable:$true] %s28
      %34 = dma.hbm_to_vmem [thread:$0]  %s27, 1024, %s29, [#allocation3], 128, 128, 8
    $region5: #{tpu_custom_call.1} parent=1 // pred_fallthru
      _
    // Predicated region
    $region6: #{tpu_custom_call.1} parent=1 // pred_check
      _
    $region7: #{tpu_custom_call.1} parent=1 // pred_check_branch
      %36 = sbr.rel (0) target = $region9
    $region8: #{tpu_custom_call.1} parent=1 // pred_region
      %38 = vsyncadd [#allocation5], 0
      %s40 = sshll.u32 %s1, 4
      %s41 = int_to_ptr.vmem [resolvable:$true] %s40
      %43 = dma.vmem_to_smem %s41, 128, [#allocation6], [#allocation5]
    $region9: #{tpu_custom_call.1} parent=1 // pred_fallthru
      _
    // Predicated region
    $region10: #{tpu_custom_call.1} parent=1 // pred_check
      _
    $region11: #{tpu_custom_call.1} parent=1 // pred_check_branch
      %45 = sbr.rel (0) target = $region13
    $region12: #{tpu_custom_call.1} parent=1 // pred_region
      %47 = vsyncadd [#allocation8], 0
      %s49 = sshll.u32 %s2, 4
      %s50 = int_to_ptr.vmem [resolvable:$true] %s49
      %52 = dma.vmem_to_smem %s50, 16, [#allocation7], [#allocation8]
    $region13: #{tpu_custom_call.1} parent=1 // pred_fallthru
      _
    // Predicated region
    $region14: #{tpu_custom_call.1} parent=1 // pred_check
      _
    $region15: #{tpu_custom_call.1} parent=1 // pred_check_branch
      %54 = sbr.rel (0) target = $region17
    $region16: #{tpu_custom_call.1} parent=1 // pred_region
      %56 = vsyncadd [#allocation8], 0
      %s58 = sshll.u32 %s3, 4
      %s59 = int_to_ptr.vmem [resolvable:$true] %s58
      %61 = dma.vmem_to_smem %s59, 16, [#allocation9], [#allocation8]
    $region17: #{tpu_custom_call.1} parent=1 // pred_fallthru
      _
    // Predicated region
    $region18: #{tpu_custom_call.1} parent=1 // pred_check
      _
    $region19: #{tpu_custom_call.1} parent=1 // pred_check_branch
      %63 = sbr.rel (0) target = $region21
    $region20: #{tpu_custom_call.1} parent=1 // pred_region
      %65 = vsyncadd [#allocation11], 0
      %s67 = sshll.u32 %s4, 4
      %s68 = int_to_ptr.vmem [resolvable:$true] %s67
      %70 = dma.vmem_to_smem %s68, 64, [#allocation10], [#allocation11]
    $region21: #{tpu_custom_call.1} parent=1 // pred_fallthru
      _
    // Predicated region
    $region22: #{tpu_custom_call.1} parent=1 // pred_check
      _
    $region23: #{tpu_custom_call.1} parent=1 // pred_check_branch
      %72 = sbr.rel (0) target = $region25
    $region24: #{tpu_custom_call.1} parent=1 // pred_region
      %74 = vsyncadd [#allocation11], 0
      %s76 = sshll.u32 %s5, 4
      %s77 = int_to_ptr.vmem [resolvable:$true] %s76
      %79 = dma.vmem_to_smem %s77, 16, [#allocation12], [#allocation11]
    $region25: #{tpu_custom_call.1} parent=1 // pred_fallthru
      _
    // Predicated region
    $region26: #{tpu_custom_call.1} parent=1 // pred_check
      _
    $region27: #{tpu_custom_call.1} parent=1 // pred_check_branch
      %81 = sbr.rel (0) target = $region29
    $region28: #{tpu_custom_call.1} parent=1 // pred_region
      %83 = vsyncadd [#allocation14], 0
      %s85 = sshll.u32 %s6, 4
      %s86 = int_to_ptr.vmem [resolvable:$true] %s85
      %88 = dma.vmem_to_smem %s86, 16, [#allocation13], [#allocation14]
    $region29: #{tpu_custom_call.1} parent=1 // pred_fallthru
      _
    // Predicated region
    $region30: #{tpu_custom_call.1} parent=1 // pred_check
      _
    $region31: #{tpu_custom_call.1} parent=1 // pred_check_branch
      %90 = sbr.rel (0) target = $region33
    $region32: #{tpu_custom_call.1} parent=1 // pred_region
      %92 = vsyncadd [#allocation14], 0
      %s94 = sshll.u32 %s7, 4
      %s95 = int_to_ptr.vmem [resolvable:$true] %s94
      %97 = dma.vmem_to_smem %s95, 64, [#allocation15], [#allocation14]
    $region33: #{tpu_custom_call.1} parent=1 // pred_fallthru
      _
    // Predicated region
    $region34: #{tpu_custom_call.1} parent=1 // pred_check
      _
    $region35: #{tpu_custom_call.1} parent=1 // pred_check_branch
      %99 = sbr.rel (0) target = $region37
    $region36: #{tpu_custom_call.1} parent=1 // pred_region
      %101 = dma.done [#allocation3], 1024
    $region37: #{tpu_custom_call.1} parent=1 // pred_fallthru
      _
    // Predicated region
    $region38: #{tpu_custom_call.1} parent=1 // pred_check
      _
    $region39: #{tpu_custom_call.1} parent=1 // pred_check_branch
      %103 = sbr.rel (0) target = $region41
    $region40: #{tpu_custom_call.1} parent=1 // pred_region
      %105 = dma.done [#allocation5], 128
    $region41: #{tpu_custom_call.1} parent=1 // pred_fallthru
      _
    // Predicated region
    $region42: #{tpu_custom_call.1} parent=1 // pred_check
      _
    $region43: #{tpu_custom_call.1} parent=1 // pred_check_branch
      %107 = sbr.rel (0) target = $region45
    $region44: #{tpu_custom_call.1} parent=1 // pred_region
      %109 = dma.done [#allocation8], 16
    $region45: #{tpu_custom_call.1} parent=1 // pred_fallthru
      _
    // Predicated region
    $region46: #{tpu_custom_call.1} parent=1 // pred_check
      _
    $region47: #{tpu_custom_call.1} parent=1 // pred_check_branch
      %111 = sbr.rel (0) target = $region49
    $region48: #{tpu_custom_call.1} parent=1 // pred_region
      %113 = dma.done [#allocation8], 16
    $region49: #{tpu_custom_call.1} parent=1 // pred_fallthru
      _
    // Predicated region
    $region50: #{tpu_custom_call.1} parent=1 // pred_check
      _
    $region51: #{tpu_custom_call.1} parent=1 // pred_check_branch
      %115 = sbr.rel (0) target = $region53
    $region52: #{tpu_custom_call.1} parent=1 // pred_region
      %117 = dma.done [#allocation11], 64
    $region53: #{tpu_custom_call.1} parent=1 // pred_fallthru
      _
    // Predicated region
    $region54: #{tpu_custom_call.1} parent=1 // pred_check
      _
    $region55: #{tpu_custom_call.1} parent=1 // pred_check_branch
      %119 = sbr.rel (0) target = $region57
    $region56: #{tpu_custom_call.1} parent=1 // pred_region
      %121 = dma.done [#allocation11], 16
    $region57: #{tpu_custom_call.1} parent=1 // pred_fallthru
      _
    // Predicated region
    $region58: #{tpu_custom_call.1} parent=1 // pred_check
      _
    $region59: #{tpu_custom_call.1} parent=1 // pred_check_branch
      %123 = sbr.rel (0) target = $region61
    $region60: #{tpu_custom_call.1} parent=1 // pred_region
      %125 = dma.done [#allocation14], 16
    $region61: #{tpu_custom_call.1} parent=1 // pred_fallthru
      _
    // Predicated region
    $region62: #{tpu_custom_call.1} parent=1 // pred_check
      _
    $region63: #{tpu_custom_call.1} parent=1 // pred_check_branch
      %127 = sbr.rel (0) target = $region65
    $region64: #{tpu_custom_call.1} parent=1 // pred_region
      %129 = dma.done [#allocation14], 64
    $region65: #{tpu_custom_call.1} parent=1 // pred_fallthru
      _
    %130 = sfence
    %v131 = vlaneseq
    %v132 = vshrl.u32 %v131, 7
    %v133 = vadd.s32 %v132, 8
    %vm134 = vcmp.ge.s32.totalorder %v132, 4
    %vm135 = vcmp.ge.s32.totalorder %v133, 4
    %vm136 = vcmp.ge.s32.totalorder %v132, 2
    %vm137 = vcmp.ge.s32.totalorder %v133, 2
    %v138 = vld [vmem:[#allocation2] sm:$0xff]
    %v139 = vld [vmem:[#allocation2 + $0x8] sm:$0xff]
    %s140 = scalar_lea.vmem [#allocation2], 16
    %v141 = vld [vmem:[%s140] sm:$0xff]
    %v142 = vld [vmem:[%s140 + $0x8] sm:$0xff]
    %s143 = scalar_lea.vmem [#allocation2], 32
    %v144 = vld [vmem:[%s143] sm:$0xff]
    %v145 = vld [vmem:[%s143 + $0x8] sm:$0xff]
    %s146 = scalar_lea.vmem [#allocation2], 48
    %v147 = vld [vmem:[%s146] sm:$0xff]
    %v148 = vld [vmem:[%s146 + $0x8] sm:$0xff]
    %s149 = sld [smem:[#allocation6]]
    %v150 = vstv %s149
    %v151 = vmul.f32 %v138, %v150
    %v152 = vmul.f32 %v139, %v150
    %s153 = sld [smem:[#allocation6 + $0x1]]
    %v154 = vstv %s153
    %v155 = vmul.f32 %v141, %v154
    %v156 = vmul.f32 %v142, %v154
    %v157 = vadd.f32 %v151, %v155
    %v158 = vadd.f32 %v152, %v156
    %s159 = sld [smem:[#allocation6 + $0x2]]
    %v160 = vstv %s159
    %v161 = vmul.f32 %v144, %v160
    %v162 = vmul.f32 %v145, %v160
    %v163 = vadd.f32 %v157, %v161
    %v164 = vadd.f32 %v158, %v162
    %s165 = sld [smem:[#allocation6 + $0x3]]
    %v166 = vstv %s165
    %v167 = vmul.f32 %v147, %v166
    %v168 = vmul.f32 %v148, %v166
    %v169 = vadd.f32 %v163, %v167
    %v170 = vadd.f32 %v164, %v168
    %s171 = sld [smem:[#allocation7]]
    %v172 = vstv %s171
    %v173 = vmul.f32 %v169, %v172
    %v174 = vmul.f32 %v170, %v172
    %s175 = sld [smem:[#allocation9]]
    %v176 = vstv %s175
    %v177 = vadd.f32 %v173, %v176
    %v178 = vadd.f32 %v174, %v176
    %v179 = vmax.f32 %v177, 0.0
    %v180 = vmax.f32 %v178, 0.0
    %vm181 = vcmask 261120
    %182 = vst.msk [vmem:[#allocation17] sm:$0xff] %vm181, %v179
    %183 = vst.msk [vmem:[#allocation17 + $0x8] sm:$0xff] %vm181, %v180
    %s184 = sld [smem:[#allocation10 + $0x100]]
    %v185 = vstv %s184
    %v186 = vmul.f32 %v179, %v185
    %v187 = vmul.f32 %v180, %v185
    %v188 = vrot.slane %v179, 4
    %v189 = vrot.slane %v180, 4
    %vm190 = vcmp.lt.s32.totalorder %v132, 4
    %v191 = vsel %vm190, %v188, %v189
    %v192 = vsel %vm190, %v189, %v188
    %v193 = vsel %vm134, %v192, 0.0
    %v194 = vsel %vm135, %v191, 0.0
    %s195 = sld [smem:[#allocation10]]
    %v196 = vstv %s195
    %v197 = vmul.f32 %v193, %v196
    %v198 = vmul.f32 %v194, %v196
    %v199 = vadd.f32 %v186, %v197
    %v200 = vadd.f32 %v187, %v198
    %v201 = vrot.slane %v179, 6
    %v202 = vrot.slane %v180, 6
    %vm203 = vcmp.lt.s32.totalorder %v132, 2
    %v204 = vsel %vm203, %v201, %v202
    %v205 = vsel %vm203, %v202, %v201
    %v206 = vsel %vm136, %v205, 0.0
    %v207 = vsel %vm137, %v204, 0.0
    %s208 = sld [smem:[#allocation10 + $0x80]]
    %v209 = vstv %s208
    %v210 = vmul.f32 %v206, %v209
    %v211 = vmul.f32 %v207, %v209
    %v212 = vadd.f32 %v199, %v210
    %v213 = vadd.f32 %v200, %v211
    %s214 = sld [smem:[#allocation12]]
    %v215 = vstv %s214
    %v216 = vmul.f32 %v212, %v215
    %v217 = vmul.f32 %v213, %v215
    %s218 = sld [smem:[#allocation13]]
    %v219 = vstv %s218
    %v220 = vadd.f32 %v216, %v219
    %v221 = vadd.f32 %v217, %v219
    %v222 = vmax.f32 %v220, 0.0
    %v223 = vmax.f32 %v221, 0.0
    %s224 = sld [smem:[#allocation15]]
    %v225 = vstv %s224
    %v226 = vmul.f32 %v222, %v225
    %v227 = vmul.f32 %v223, %v225
    %v228 = vadd.f32 %v138, %v226
    %v229 = vadd.f32 %v139, %v227
    %s230 = sld [smem:[#allocation15 + $0x80]]
    %v231 = vstv %s230
    %v232 = vmul.f32 %v222, %v231
    %v233 = vmul.f32 %v223, %v231
    %v234 = vadd.f32 %v141, %v232
    %v235 = vadd.f32 %v142, %v233
    %s236 = sld [smem:[#allocation15 + $0x100]]
    %v237 = vstv %s236
    %v238 = vmul.f32 %v222, %v237
    %v239 = vmul.f32 %v223, %v237
    %v240 = vadd.f32 %v144, %v238
    %v241 = vadd.f32 %v145, %v239
    %s242 = sld [smem:[#allocation15 + $0x180]]
    %v243 = vstv %s242
    %v244 = vmul.f32 %v222, %v243
    %v245 = vmul.f32 %v223, %v243
    %v246 = vadd.f32 %v147, %v244
    %v247 = vadd.f32 %v148, %v245
    %s248 = sld [smem:[#allocation6 + $0x80]]
    %v249 = vstv %s248
    %v250 = vmul.f32 %v138, %v249
    %v251 = vmul.f32 %v139, %v249
    %s252 = sld [smem:[#allocation6 + $0x81]]
    %v253 = vstv %s252
    %v254 = vmul.f32 %v141, %v253
    %v255 = vmul.f32 %v142, %v253
    %v256 = vadd.f32 %v250, %v254
    %v257 = vadd.f32 %v251, %v255
    %s258 = sld [smem:[#allocation6 + $0x82]]
    %v259 = vstv %s258
    %v260 = vmul.f32 %v144, %v259
    %v261 = vmul.f32 %v145, %v259
    %v262 = vadd.f32 %v256, %v260
    %v263 = vadd.f32 %v257, %v261
    %s264 = sld [smem:[#allocation6 + $0x83]]
    %v265 = vstv %s264
    %v266 = vmul.f32 %v147, %v265
    %v267 = vmul.f32 %v148, %v265
    %v268 = vadd.f32 %v262, %v266
    %v269 = vadd.f32 %v263, %v267
    %s270 = sld [smem:[#allocation7 + $0x1]]
    %v271 = vstv %s270
    %v272 = vmul.f32 %v268, %v271
    %v273 = vmul.f32 %v269, %v271
    %s274 = sld [smem:[#allocation9 + $0x1]]
    %v275 = vstv %s274
    %v276 = vadd.f32 %v272, %v275
    %v277 = vadd.f32 %v273, %v275
    %v278 = vmax.f32 %v276, 0.0
    %v279 = vmax.f32 %v277, 0.0
    %s280 = scalar_lea.vmem [#allocation17], 16
    %281 = vst.msk [vmem:[%s280] sm:$0xff] %vm181, %v278
    %282 = vst.msk [vmem:[%s280 + $0x8] sm:$0xff] %vm181, %v279
    %s283 = sld [smem:[#allocation10 + $0x101]]
    %v284 = vstv %s283
    %v285 = vmul.f32 %v278, %v284
    %v286 = vmul.f32 %v279, %v284
    %v287 = vrot.slane %v278, 4
    %v288 = vrot.slane %v279, 4
    %v289 = vsel %vm190, %v287, %v288
    %v290 = vsel %vm190, %v288, %v287
    %v291 = vsel %vm134, %v290, 0.0
    %v292 = vsel %vm135, %v289, 0.0
    %s293 = sld [smem:[#allocation10 + $0x1]]
    %v294 = vstv %s293
    %v295 = vmul.f32 %v291, %v294
    %v296 = vmul.f32 %v292, %v294
    %v297 = vadd.f32 %v285, %v295
    %v298 = vadd.f32 %v286, %v296
    %v299 = vrot.slane %v278, 6
    %v300 = vrot.slane %v279, 6
    %v301 = vsel %vm203, %v299, %v300
    %v302 = vsel %vm203, %v300, %v299
    %v303 = vsel %vm136, %v302, 0.0
    %v304 = vsel %vm137, %v301, 0.0
    %s305 = sld [smem:[#allocation10 + $0x81]]
    %v306 = vstv %s305
    %v307 = vmul.f32 %v303, %v306
    %v308 = vmul.f32 %v304, %v306
    %v309 = vadd.f32 %v297, %v307
    %v310 = vadd.f32 %v298, %v308
    %s311 = sld [smem:[#allocation12 + $0x1]]
    %v312 = vstv %s311
    %v313 = vmul.f32 %v309, %v312
    %v314 = vmul.f32 %v310, %v312
    %s315 = sld [smem:[#allocation13 + $0x1]]
    %v316 = vstv %s315
    %v317 = vadd.f32 %v313, %v316
    %v318 = vadd.f32 %v314, %v316
    %v319 = vmax.f32 %v317, 0.0
    %v320 = vmax.f32 %v318, 0.0
    %s321 = sld [smem:[#allocation15 + $0x1]]
    %v322 = vstv %s321
    %v323 = vmul.f32 %v319, %v322
    %v324 = vmul.f32 %v320, %v322
    %v325 = vadd.f32 %v228, %v323
    %v326 = vadd.f32 %v229, %v324
    %s327 = sld [smem:[#allocation15 + $0x81]]
    %v328 = vstv %s327
    %v329 = vmul.f32 %v319, %v328
    %v330 = vmul.f32 %v320, %v328
    %v331 = vadd.f32 %v234, %v329
    %v332 = vadd.f32 %v235, %v330
    %s333 = sld [smem:[#allocation15 + $0x101]]
    %v334 = vstv %s333
    %v335 = vmul.f32 %v319, %v334
    %v336 = vmul.f32 %v320, %v334
    %v337 = vadd.f32 %v240, %v335
    %v338 = vadd.f32 %v241, %v336
    %s339 = sld [smem:[#allocation15 + $0x181]]
    %v340 = vstv %s339
    %v341 = vmul.f32 %v319, %v340
    %v342 = vmul.f32 %v320, %v340
    %v343 = vadd.f32 %v246, %v341
    %v344 = vadd.f32 %v247, %v342
    %s345 = sld [smem:[#allocation6 + $0x100]]
    %v346 = vstv %s345
    %v347 = vmul.f32 %v138, %v346
    %v348 = vmul.f32 %v139, %v346
    %s349 = sld [smem:[#allocation6 + $0x101]]
    %v350 = vstv %s349
    %v351 = vmul.f32 %v141, %v350
    %v352 = vmul.f32 %v142, %v350
    %v353 = vadd.f32 %v347, %v351
    %v354 = vadd.f32 %v348, %v352
    %s355 = sld [smem:[#allocation6 + $0x102]]
    %v356 = vstv %s355
    %v357 = vmul.f32 %v144, %v356
    %v358 = vmul.f32 %v145, %v356
    %v359 = vadd.f32 %v353, %v357
    %v360 = vadd.f32 %v354, %v358
    %s361 = sld [smem:[#allocation6 + $0x103]]
    %v362 = vstv %s361
    %v363 = vmul.f32 %v147, %v362
    %v364 = vmul.f32 %v148, %v362
    %v365 = vadd.f32 %v359, %v363
    %v366 = vadd.f32 %v360, %v364
    %s367 = sld [smem:[#allocation7 + $0x2]]
    %v368 = vstv %s367
    %v369 = vmul.f32 %v365, %v368
    %v370 = vmul.f32 %v366, %v368
    %s371 = sld [smem:[#allocation9 + $0x2]]
    %v372 = vstv %s371
    %v373 = vadd.f32 %v369, %v372
    %v374 = vadd.f32 %v370, %v372
    %v375 = vmax.f32 %v373, 0.0
    %v376 = vmax.f32 %v374, 0.0
    %s377 = scalar_lea.vmem [#allocation17], 32
    %378 = vst.msk [vmem:[%s377] sm:$0xff] %vm181, %v375
    %379 = vst.msk [vmem:[%s377 + $0x8] sm:$0xff] %vm181, %v376
    %s380 = sld [smem:[#allocation10 + $0x102]]
    %v381 = vstv %s380
    %v382 = vmul.f32 %v375, %v381
    %v383 = vmul.f32 %v376, %v381
    %v384 = vrot.slane %v375, 4
    %v385 = vrot.slane %v376, 4
    %v386 = vsel %vm190, %v384, %v385
    %v387 = vsel %vm190, %v385, %v384
    %v388 = vsel %vm134, %v387, 0.0
    %v389 = vsel %vm135, %v386, 0.0
    %s390 = sld [smem:[#allocation10 + $0x2]]
    %v391 = vstv %s390
    %v392 = vmul.f32 %v388, %v391
    %v393 = vmul.f32 %v389, %v391
    %v394 = vadd.f32 %v382, %v392
    %v395 = vadd.f32 %v383, %v393
    %v396 = vrot.slane %v375, 6
    %v397 = vrot.slane %v376, 6
    %v398 = vsel %vm203, %v396, %v397
    %v399 = vsel %vm203, %v397, %v396
    %v400 = vsel %vm136, %v399, 0.0
    %v401 = vsel %vm137, %v398, 0.0
    %s402 = sld [smem:[#allocation10 + $0x82]]
    %v403 = vstv %s402
    %v404 = vmul.f32 %v400, %v403
    %v405 = vmul.f32 %v401, %v403
    %v406 = vadd.f32 %v394, %v404
    %v407 = vadd.f32 %v395, %v405
    %s408 = sld [smem:[#allocation12 + $0x2]]
    %v409 = vstv %s408
    %v410 = vmul.f32 %v406, %v409
    %v411 = vmul.f32 %v407, %v409
    %s412 = sld [smem:[#allocation13 + $0x2]]
    %v413 = vstv %s412
    %v414 = vadd.f32 %v410, %v413
    %v415 = vadd.f32 %v411, %v413
    %v416 = vmax.f32 %v414, 0.0
    %v417 = vmax.f32 %v415, 0.0
    %s418 = sld [smem:[#allocation15 + $0x2]]
    %v419 = vstv %s418
    %v420 = vmul.f32 %v416, %v419
    %v421 = vmul.f32 %v417, %v419
    %v422 = vadd.f32 %v325, %v420
    %v423 = vadd.f32 %v326, %v421
    %s424 = sld [smem:[#allocation15 + $0x82]]
    %v425 = vstv %s424
    %v426 = vmul.f32 %v416, %v425
    %v427 = vmul.f32 %v417, %v425
    %v428 = vadd.f32 %v331, %v426
    %v429 = vadd.f32 %v332, %v427
    %s430 = sld [smem:[#allocation15 + $0x102]]
    %v431 = vstv %s430
    %v432 = vmul.f32 %v416, %v431
    %v433 = vmul.f32 %v417, %v431
    %v434 = vadd.f32 %v337, %v432
    %v435 = vadd.f32 %v338, %v433
    %s436 = sld [smem:[#allocation15 + $0x182]]
    %v437 = vstv %s436
    %v438 = vmul.f32 %v416, %v437
    %v439 = vmul.f32 %v417, %v437
    %v440 = vadd.f32 %v343, %v438
    %v441 = vadd.f32 %v344, %v439
    %s442 = sld [smem:[#allocation6 + $0x180]]
    %v443 = vstv %s442
    %v444 = vmul.f32 %v138, %v443
    %v445 = vmul.f32 %v139, %v443
    %s446 = sld [smem:[#allocation6 + $0x181]]
    %v447 = vstv %s446
    %v448 = vmul.f32 %v141, %v447
    %v449 = vmul.f32 %v142, %v447
    %v450 = vadd.f32 %v444, %v448
    %v451 = vadd.f32 %v445, %v449
    %s452 = sld [smem:[#allocation6 + $0x182]]
    %v453 = vstv %s452
    %v454 = vmul.f32 %v144, %v453
    %v455 = vmul.f32 %v145, %v453
    %v456 = vadd.f32 %v450, %v454
    %v457 = vadd.f32 %v451, %v455
    %s458 = sld [smem:[#allocation6 + $0x183]]
    %v459 = vstv %s458
    %v460 = vmul.f32 %v147, %v459
    %v461 = vmul.f32 %v148, %v459
    %v462 = vadd.f32 %v456, %v460
    %v463 = vadd.f32 %v457, %v461
    %s464 = sld [smem:[#allocation7 + $0x3]]
    %v465 = vstv %s464
    %v466 = vmul.f32 %v462, %v465
    %v467 = vmul.f32 %v463, %v465
    %s468 = sld [smem:[#allocation9 + $0x3]]
    %v469 = vstv %s468
    %v470 = vadd.f32 %v466, %v469
    %v471 = vadd.f32 %v467, %v469
    %v472 = vmax.f32 %v470, 0.0
    %v473 = vmax.f32 %v471, 0.0
    %s474 = scalar_lea.vmem [#allocation17], 48
    %475 = vst.msk [vmem:[%s474] sm:$0xff] %vm181, %v472
    %476 = vst.msk [vmem:[%s474 + $0x8] sm:$0xff] %vm181, %v473
    %s477 = sld [smem:[#allocation10 + $0x103]]
    %v478 = vstv %s477
    %v479 = vmul.f32 %v472, %v478
    %v480 = vmul.f32 %v473, %v478
    %v481 = vrot.slane %v472, 4
    %v482 = vrot.slane %v473, 4
    %v483 = vsel %vm190, %v481, %v482
    %v484 = vsel %vm190, %v482, %v481
    %v485 = vsel %vm134, %v484, 0.0
    %v486 = vsel %vm135, %v483, 0.0
    %s487 = sld [smem:[#allocation10 + $0x3]]
    %v488 = vstv %s487
    %v489 = vmul.f32 %v485, %v488
    %v490 = vmul.f32 %v486, %v488
    %v491 = vadd.f32 %v479, %v489
    %v492 = vadd.f32 %v480, %v490
    %v493 = vrot.slane %v472, 6
    %v494 = vrot.slane %v473, 6
    %v495 = vsel %vm203, %v493, %v494
    %v496 = vsel %vm203, %v494, %v493
    %v497 = vsel %vm136, %v496, 0.0
    %v498 = vsel %vm137, %v495, 0.0
    %s499 = sld [smem:[#allocation10 + $0x83]]
    %v500 = vstv %s499
    %v501 = vmul.f32 %v497, %v500
    %v502 = vmul.f32 %v498, %v500
    %v503 = vadd.f32 %v491, %v501
    %v504 = vadd.f32 %v492, %v502
    %s505 = sld [smem:[#allocation12 + $0x3]]
    %v506 = vstv %s505
    %v507 = vmul.f32 %v503, %v506
    %v508 = vmul.f32 %v504, %v506
    %s509 = sld [smem:[#allocation13 + $0x3]]
    %v510 = vstv %s509
    %v511 = vadd.f32 %v507, %v510
    %v512 = vadd.f32 %v508, %v510
    %v513 = vmax.f32 %v511, 0.0
    %v514 = vmax.f32 %v512, 0.0
    %s515 = sld [smem:[#allocation15 + $0x3]]
    %v516 = vstv %s515
    %v517 = vmul.f32 %v513, %v516
    %v518 = vmul.f32 %v514, %v516
    %v519 = vadd.f32 %v422, %v517
    %v520 = vadd.f32 %v423, %v518
    %s521 = sld [smem:[#allocation15 + $0x83]]
    %v522 = vstv %s521
    %v523 = vmul.f32 %v513, %v522
    %v524 = vmul.f32 %v514, %v522
    %v525 = vadd.f32 %v428, %v523
    %v526 = vadd.f32 %v429, %v524
    %s527 = sld [smem:[#allocation15 + $0x103]]
    %v528 = vstv %s527
    %v529 = vmul.f32 %v513, %v528
    %v530 = vmul.f32 %v514, %v528
    %v531 = vadd.f32 %v434, %v529
    %v532 = vadd.f32 %v435, %v530
    %s533 = sld [smem:[#allocation15 + $0x183]]
    %v534 = vstv %s533
    %v535 = vmul.f32 %v513, %v534
    %v536 = vmul.f32 %v514, %v534
    %v537 = vadd.f32 %v440, %v535
    %v538 = vadd.f32 %v441, %v536
    %s539 = sld [smem:[#allocation6 + $0x200]]
    %v540 = vstv %s539
    %v541 = vmul.f32 %v138, %v540
    %v542 = vmul.f32 %v139, %v540
    %s543 = sld [smem:[#allocation6 + $0x201]]
    %v544 = vstv %s543
    %v545 = vmul.f32 %v141, %v544
    %v546 = vmul.f32 %v142, %v544
    %v547 = vadd.f32 %v541, %v545
    %v548 = vadd.f32 %v542, %v546
    %s549 = sld [smem:[#allocation6 + $0x202]]
    %v550 = vstv %s549
    %v551 = vmul.f32 %v144, %v550
    %v552 = vmul.f32 %v145, %v550
    %v553 = vadd.f32 %v547, %v551
    %v554 = vadd.f32 %v548, %v552
    %s555 = sld [smem:[#allocation6 + $0x203]]
    %v556 = vstv %s555
    %v557 = vmul.f32 %v147, %v556
    %v558 = vmul.f32 %v148, %v556
    %v559 = vadd.f32 %v553, %v557
    %v560 = vadd.f32 %v554, %v558
    %s561 = sld [smem:[#allocation7 + $0x4]]
    %v562 = vstv %s561
    %v563 = vmul.f32 %v559, %v562
    %v564 = vmul.f32 %v560, %v562
    %s565 = sld [smem:[#allocation9 + $0x4]]
    %v566 = vstv %s565
    %v567 = vadd.f32 %v563, %v566
    %v568 = vadd.f32 %v564, %v566
    %v569 = vmax.f32 %v567, 0.0
    %v570 = vmax.f32 %v568, 0.0
    %s571 = scalar_lea.vmem [#allocation17], 64
    %572 = vst.msk [vmem:[%s571] sm:$0xff] %vm181, %v569
    %573 = vst.msk [vmem:[%s571 + $0x8] sm:$0xff] %vm181, %v570
    %s574 = sld [smem:[#allocation10 + $0x104]]
    %v575 = vstv %s574
    %v576 = vmul.f32 %v569, %v575
    %v577 = vmul.f32 %v570, %v575
    %v578 = vrot.slane %v569, 4
    %v579 = vrot.slane %v570, 4
    %v580 = vsel %vm190, %v578, %v579
    %v581 = vsel %vm190, %v579, %v578
    %v582 = vsel %vm134, %v581, 0.0
    %v583 = vsel %vm135, %v580, 0.0
    %s584 = sld [smem:[#allocation10 + $0x4]]
    %v585 = vstv %s584
    %v586 = vmul.f32 %v582, %v585
    %v587 = vmul.f32 %v583, %v585
    %v588 = vadd.f32 %v576, %v586
    %v589 = vadd.f32 %v577, %v587
    %v590 = vrot.slane %v569, 6
    %v591 = vrot.slane %v570, 6
    %v592 = vsel %vm203, %v590, %v591
    %v593 = vsel %vm203, %v591, %v590
    %v594 = vsel %vm136, %v593, 0.0
    %v595 = vsel %vm137, %v592, 0.0
    %s596 = sld [smem:[#allocation10 + $0x84]]
    %v597 = vstv %s596
    %v598 = vmul.f32 %v594, %v597
    %v599 = vmul.f32 %v595, %v597
    %v600 = vadd.f32 %v588, %v598
    %v601 = vadd.f32 %v589, %v599
    %s602 = sld [smem:[#allocation12 + $0x4]]
    %v603 = vstv %s602
    %v604 = vmul.f32 %v600, %v603
    %v605 = vmul.f32 %v601, %v603
    %s606 = sld [smem:[#allocation13 + $0x4]]
    %v607 = vstv %s606
    %v608 = vadd.f32 %v604, %v607
    %v609 = vadd.f32 %v605, %v607
    %v610 = vmax.f32 %v608, 0.0
    %v611 = vmax.f32 %v609, 0.0
    %s612 = sld [smem:[#allocation15 + $0x4]]
    %v613 = vstv %s612
    %v614 = vmul.f32 %v610, %v613
    %v615 = vmul.f32 %v611, %v613
    %v616 = vadd.f32 %v519, %v614
    %v617 = vadd.f32 %v520, %v615
    %s618 = sld [smem:[#allocation15 + $0x84]]
    %v619 = vstv %s618
    %v620 = vmul.f32 %v610, %v619
    %v621 = vmul.f32 %v611, %v619
    %v622 = vadd.f32 %v525, %v620
    %v623 = vadd.f32 %v526, %v621
    %s624 = sld [smem:[#allocation15 + $0x104]]
    %v625 = vstv %s624
    %v626 = vmul.f32 %v610, %v625
    %v627 = vmul.f32 %v611, %v625
    %v628 = vadd.f32 %v531, %v626
    %v629 = vadd.f32 %v532, %v627
    %s630 = sld [smem:[#allocation15 + $0x184]]
    %v631 = vstv %s630
    %v632 = vmul.f32 %v610, %v631
    %v633 = vmul.f32 %v611, %v631
    %v634 = vadd.f32 %v537, %v632
    %v635 = vadd.f32 %v538, %v633
    %s636 = sld [smem:[#allocation6 + $0x280]]
    %v637 = vstv %s636
    %v638 = vmul.f32 %v138, %v637
    %v639 = vmul.f32 %v139, %v637
    %s640 = sld [smem:[#allocation6 + $0x281]]
    %v641 = vstv %s640
    %v642 = vmul.f32 %v141, %v641
    %v643 = vmul.f32 %v142, %v641
    %v644 = vadd.f32 %v638, %v642
    %v645 = vadd.f32 %v639, %v643
    %s646 = sld [smem:[#allocation6 + $0x282]]
    %v647 = vstv %s646
    %v648 = vmul.f32 %v144, %v647
    %v649 = vmul.f32 %v145, %v647
    %v650 = vadd.f32 %v644, %v648
    %v651 = vadd.f32 %v645, %v649
    %s652 = sld [smem:[#allocation6 + $0x283]]
    %v653 = vstv %s652
    %v654 = vmul.f32 %v147, %v653
    %v655 = vmul.f32 %v148, %v653
    %v656 = vadd.f32 %v650, %v654
    %v657 = vadd.f32 %v651, %v655
    %s658 = sld [smem:[#allocation7 + $0x5]]
    %v659 = vstv %s658
    %v660 = vmul.f32 %v656, %v659
    %v661 = vmul.f32 %v657, %v659
    %s662 = sld [smem:[#allocation9 + $0x5]]
    %v663 = vstv %s662
    %v664 = vadd.f32 %v660, %v663
    %v665 = vadd.f32 %v661, %v663
    %v666 = vmax.f32 %v664, 0.0
    %v667 = vmax.f32 %v665, 0.0
    %s668 = scalar_lea.vmem [#allocation17], 80
    %669 = vst.msk [vmem:[%s668] sm:$0xff] %vm181, %v666
    %670 = vst.msk [vmem:[%s668 + $0x8] sm:$0xff] %vm181, %v667
    %s671 = sld [smem:[#allocation10 + $0x105]]
    %v672 = vstv %s671
    %v673 = vmul.f32 %v666, %v672
    %v674 = vmul.f32 %v667, %v672
    %v675 = vrot.slane %v666, 4
    %v676 = vrot.slane %v667, 4
    %v677 = vsel %vm190, %v675, %v676
    %v678 = vsel %vm190, %v676, %v675
    %v679 = vsel %vm134, %v678, 0.0
    %v680 = vsel %vm135, %v677, 0.0
    %s681 = sld [smem:[#allocation10 + $0x5]]
    %v682 = vstv %s681
    %v683 = vmul.f32 %v679, %v682
    %v684 = vmul.f32 %v680, %v682
    %v685 = vadd.f32 %v673, %v683
    %v686 = vadd.f32 %v674, %v684
    %v687 = vrot.slane %v666, 6
    %v688 = vrot.slane %v667, 6
    %v689 = vsel %vm203, %v687, %v688
    %v690 = vsel %vm203, %v688, %v687
    %v691 = vsel %vm136, %v690, 0.0
    %v692 = vsel %vm137, %v689, 0.0
    %s693 = sld [smem:[#allocation10 + $0x85]]
    %v694 = vstv %s693
    %v695 = vmul.f32 %v691, %v694
    %v696 = vmul.f32 %v692, %v694
    %v697 = vadd.f32 %v685, %v695
    %v698 = vadd.f32 %v686, %v696
    %s699 = sld [smem:[#allocation12 + $0x5]]
    %v700 = vstv %s699
    %v701 = vmul.f32 %v697, %v700
    %v702 = vmul.f32 %v698, %v700
    %s703 = sld [smem:[#allocation13 + $0x5]]
    %v704 = vstv %s703
    %v705 = vadd.f32 %v701, %v704
    %v706 = vadd.f32 %v702, %v704
    %v707 = vmax.f32 %v705, 0.0
    %v708 = vmax.f32 %v706, 0.0
    %s709 = sld [smem:[#allocation15 + $0x5]]
    %v710 = vstv %s709
    %v711 = vmul.f32 %v707, %v710
    %v712 = vmul.f32 %v708, %v710
    %v713 = vadd.f32 %v616, %v711
    %v714 = vadd.f32 %v617, %v712
    %s715 = sld [smem:[#allocation15 + $0x85]]
    %v716 = vstv %s715
    %v717 = vmul.f32 %v707, %v716
    %v718 = vmul.f32 %v708, %v716
    %v719 = vadd.f32 %v622, %v717
    %v720 = vadd.f32 %v623, %v718
    %s721 = sld [smem:[#allocation15 + $0x105]]
    %v722 = vstv %s721
    %v723 = vmul.f32 %v707, %v722
    %v724 = vmul.f32 %v708, %v722
    %v725 = vadd.f32 %v628, %v723
    %v726 = vadd.f32 %v629, %v724
    %s727 = sld [smem:[#allocation15 + $0x185]]
    %v728 = vstv %s727
    %v729 = vmul.f32 %v707, %v728
    %v730 = vmul.f32 %v708, %v728
    %v731 = vadd.f32 %v634, %v729
    %v732 = vadd.f32 %v635, %v730
    %s733 = sld [smem:[#allocation6 + $0x300]]
    %v734 = vstv %s733
    %v735 = vmul.f32 %v138, %v734
    %v736 = vmul.f32 %v139, %v734
    %s737 = sld [smem:[#allocation6 + $0x301]]
    %v738 = vstv %s737
    %v739 = vmul.f32 %v141, %v738
    %v740 = vmul.f32 %v142, %v738
    %v741 = vadd.f32 %v735, %v739
    %v742 = vadd.f32 %v736, %v740
    %s743 = sld [smem:[#allocation6 + $0x302]]
    %v744 = vstv %s743
    %v745 = vmul.f32 %v144, %v744
    %v746 = vmul.f32 %v145, %v744
    %v747 = vadd.f32 %v741, %v745
    %v748 = vadd.f32 %v742, %v746
    %s749 = sld [smem:[#allocation6 + $0x303]]
    %v750 = vstv %s749
    %v751 = vmul.f32 %v147, %v750
    %v752 = vmul.f32 %v148, %v750
    %v753 = vadd.f32 %v747, %v751
    %v754 = vadd.f32 %v748, %v752
    %s755 = sld [smem:[#allocation7 + $0x6]]
    %v756 = vstv %s755
    %v757 = vmul.f32 %v753, %v756
    %v758 = vmul.f32 %v754, %v756
    %s759 = sld [smem:[#allocation9 + $0x6]]
    %v760 = vstv %s759
    %v761 = vadd.f32 %v757, %v760
    %v762 = vadd.f32 %v758, %v760
    %v763 = vmax.f32 %v761, 0.0
    %v764 = vmax.f32 %v762, 0.0
    %s765 = scalar_lea.vmem [#allocation17], 96
    %766 = vst.msk [vmem:[%s765] sm:$0xff] %vm181, %v763
    %767 = vst.msk [vmem:[%s765 + $0x8] sm:$0xff] %vm181, %v764
    %s768 = sld [smem:[#allocation10 + $0x106]]
    %v769 = vstv %s768
    %v770 = vmul.f32 %v763, %v769
    %v771 = vmul.f32 %v764, %v769
    %v772 = vrot.slane %v763, 4
    %v773 = vrot.slane %v764, 4
    %v774 = vsel %vm190, %v772, %v773
    %v775 = vsel %vm190, %v773, %v772
    %v776 = vsel %vm134, %v775, 0.0
    %v777 = vsel %vm135, %v774, 0.0
    %s778 = sld [smem:[#allocation10 + $0x6]]
    %v779 = vstv %s778
    %v780 = vmul.f32 %v776, %v779
    %v781 = vmul.f32 %v777, %v779
    %v782 = vadd.f32 %v770, %v780
    %v783 = vadd.f32 %v771, %v781
    %v784 = vrot.slane %v763, 6
    %v785 = vrot.slane %v764, 6
    %v786 = vsel %vm203, %v784, %v785
    %v787 = vsel %vm203, %v785, %v784
    %v788 = vsel %vm136, %v787, 0.0
    %v789 = vsel %vm137, %v786, 0.0
    %s790 = sld [smem:[#allocation10 + $0x86]]
    %v791 = vstv %s790
    %v792 = vmul.f32 %v788, %v791
    %v793 = vmul.f32 %v789, %v791
    %v794 = vadd.f32 %v782, %v792
    %v795 = vadd.f32 %v783, %v793
    %s796 = sld [smem:[#allocation12 + $0x6]]
    %v797 = vstv %s796
    %v798 = vmul.f32 %v794, %v797
    %v799 = vmul.f32 %v795, %v797
    %s800 = sld [smem:[#allocation13 + $0x6]]
    %v801 = vstv %s800
    %v802 = vadd.f32 %v798, %v801
    %v803 = vadd.f32 %v799, %v801
    %v804 = vmax.f32 %v802, 0.0
    %v805 = vmax.f32 %v803, 0.0
    %s806 = sld [smem:[#allocation15 + $0x6]]
    %v807 = vstv %s806
    %v808 = vmul.f32 %v804, %v807
    %v809 = vmul.f32 %v805, %v807
    %v810 = vadd.f32 %v713, %v808
    %v811 = vadd.f32 %v714, %v809
    %s812 = sld [smem:[#allocation15 + $0x86]]
    %v813 = vstv %s812
    %v814 = vmul.f32 %v804, %v813
    %v815 = vmul.f32 %v805, %v813
    %v816 = vadd.f32 %v719, %v814
    %v817 = vadd.f32 %v720, %v815
    %s818 = sld [smem:[#allocation15 + $0x106]]
    %v819 = vstv %s818
    %v820 = vmul.f32 %v804, %v819
    %v821 = vmul.f32 %v805, %v819
    %v822 = vadd.f32 %v725, %v820
    %v823 = vadd.f32 %v726, %v821
    %s824 = sld [smem:[#allocation15 + $0x186]]
    %v825 = vstv %s824
    %v826 = vmul.f32 %v804, %v825
    %v827 = vmul.f32 %v805, %v825
    %v828 = vadd.f32 %v731, %v826
    %v829 = vadd.f32 %v732, %v827
    %s830 = sld [smem:[#allocation6 + $0x380]]
    %v831 = vstv %s830
    %v832 = vmul.f32 %v138, %v831
    %v833 = vmul.f32 %v139, %v831
    %s834 = sld [smem:[#allocation6 + $0x381]]
    %v835 = vstv %s834
    %v836 = vmul.f32 %v141, %v835
    %v837 = vmul.f32 %v142, %v835
    %v838 = vadd.f32 %v832, %v836
    %v839 = vadd.f32 %v833, %v837
    %s840 = sld [smem:[#allocation6 + $0x382]]
    %v841 = vstv %s840
    %v842 = vmul.f32 %v144, %v841
    %v843 = vmul.f32 %v145, %v841
    %v844 = vadd.f32 %v838, %v842
    %v845 = vadd.f32 %v839, %v843
    %s846 = sld [smem:[#allocation6 + $0x383]]
    %v847 = vstv %s846
    %v848 = vmul.f32 %v147, %v847
    %v849 = vmul.f32 %v148, %v847
    %v850 = vadd.f32 %v844, %v848
    %v851 = vadd.f32 %v845, %v849
    %s852 = sld [smem:[#allocation7 + $0x7]]
    %v853 = vstv %s852
    %v854 = vmul.f32 %v850, %v853
    %v855 = vmul.f32 %v851, %v853
    %s856 = sld [smem:[#allocation9 + $0x7]]
    %v857 = vstv %s856
    %v858 = vadd.f32 %v854, %v857
    %v859 = vadd.f32 %v855, %v857
    %v860 = vmax.f32 %v858, 0.0
    %v861 = vmax.f32 %v859, 0.0
    %s862 = scalar_lea.vmem [#allocation17], 112
    %863 = vst.msk [vmem:[%s862] sm:$0xff] %vm181, %v860
    %864 = vst.msk [vmem:[%s862 + $0x8] sm:$0xff] %vm181, %v861
    %s865 = sld [smem:[#allocation10 + $0x107]]
    %v866 = vstv %s865
    %v867 = vmul.f32 %v860, %v866
    %v868 = vmul.f32 %v861, %v866
    %v869 = vrot.slane %v860, 4
    %v870 = vrot.slane %v861, 4
    %v871 = vsel %vm190, %v869, %v870
    %v872 = vsel %vm190, %v870, %v869
    %v873 = vsel %vm134, %v872, 0.0
    %v874 = vsel %vm135, %v871, 0.0
    %s875 = sld [smem:[#allocation10 + $0x7]]
    %v876 = vstv %s875
    %v877 = vmul.f32 %v873, %v876
    %v878 = vmul.f32 %v874, %v876
    %v879 = vadd.f32 %v867, %v877
    %v880 = vadd.f32 %v868, %v878
    %v881 = vrot.slane %v860, 6
    %v882 = vrot.slane %v861, 6
    %v883 = vsel %vm203, %v881, %v882
    %v884 = vsel %vm203, %v882, %v881
    %v885 = vsel %vm136, %v884, 0.0
    %v886 = vsel %vm137, %v883, 0.0
    %s887 = sld [smem:[#allocation10 + $0x87]]
    %v888 = vstv %s887
    %v889 = vmul.f32 %v885, %v888
    %v890 = vmul.f32 %v886, %v888
    %v891 = vadd.f32 %v879, %v889
    %v892 = vadd.f32 %v880, %v890
    %s893 = sld [smem:[#allocation12 + $0x7]]
    %v894 = vstv %s893
    %v895 = vmul.f32 %v891, %v894
    %v896 = vmul.f32 %v892, %v894
    %s897 = sld [smem:[#allocation13 + $0x7]]
    %v898 = vstv %s897
    %v899 = vadd.f32 %v895, %v898
    %v900 = vadd.f32 %v896, %v898
    %v901 = vmax.f32 %v899, 0.0
    %v902 = vmax.f32 %v900, 0.0
    %s903 = sld [smem:[#allocation15 + $0x7]]
    %v904 = vstv %s903
    %v905 = vmul.f32 %v901, %v904
    %v906 = vmul.f32 %v902, %v904
    %v907 = vadd.f32 %v810, %v905
    %v908 = vadd.f32 %v811, %v906
    %s909 = sld [smem:[#allocation15 + $0x87]]
    %v910 = vstv %s909
    %v911 = vmul.f32 %v901, %v910
    %v912 = vmul.f32 %v902, %v910
    %v913 = vadd.f32 %v816, %v911
    %v914 = vadd.f32 %v817, %v912
    %s915 = sld [smem:[#allocation15 + $0x107]]
    %v916 = vstv %s915
    %v917 = vmul.f32 %v901, %v916
    %v918 = vmul.f32 %v902, %v916
    %v919 = vadd.f32 %v822, %v917
    %v920 = vadd.f32 %v823, %v918
    %s921 = sld [smem:[#allocation15 + $0x187]]
    %v922 = vstv %s921
    %v923 = vmul.f32 %v901, %v922
    %v924 = vmul.f32 %v902, %v922
    %v925 = vadd.f32 %v828, %v923
    %v926 = vadd.f32 %v829, %v924
    %927 = vst.msk [vmem:[#allocation16] sm:$0xff] %vm181, %v907
    %928 = vst.msk [vmem:[#allocation16 + $0x8] sm:$0xff] %vm181, %v908
    %s929 = scalar_lea.vmem [#allocation16], 16
    %930 = vst.msk [vmem:[%s929] sm:$0xff] %vm181, %v913
    %931 = vst.msk [vmem:[%s929 + $0x8] sm:$0xff] %vm181, %v914
    %s932 = scalar_lea.vmem [#allocation16], 32
    %933 = vst.msk [vmem:[%s932] sm:$0xff] %vm181, %v919
    %934 = vst.msk [vmem:[%s932 + $0x8] sm:$0xff] %vm181, %v920
    %s935 = scalar_lea.vmem [#allocation16], 48
    %936 = vst.msk [vmem:[%s935] sm:$0xff] %vm181, %v925
    %937 = vst.msk [vmem:[%s935 + $0x8] sm:$0xff] %vm181, %v926
    // Predicated region
    $region66: #{tpu_custom_call.1} parent=1 // pred_check
      _
    $region67: #{tpu_custom_call.1} parent=1 // pred_check_branch
      %939 = sbr.rel (0) target = $region69
    $region68: #{tpu_custom_call.1} parent=1 // pred_region
      %941 = vsyncadd [#allocation4], 0
      %s942 = sshll.u32 [#allocation16], 4
      %s943 = int_to_ptr.vmem [resolvable:$true] %s942
      %s944 = sshll.u32 %s8, 4
      %s945 = int_to_ptr.hbm [resolvable:$true] %s944
      %950 = dma.vmem_to_hbm [thread:$0]  %s943, 1024, %s945, [#allocation4], 128, 128, 8
    $region69: #{tpu_custom_call.1} parent=1 // pred_fallthru
      _
    // Predicated region
    $region70: #{tpu_custom_call.1} parent=1 // pred_check
      _
    $region71: #{tpu_custom_call.1} parent=1 // pred_check_branch
      %952 = sbr.rel (0) target = $region73
    $region72: #{tpu_custom_call.1} parent=1 // pred_region
      %954 = vsyncadd [#allocation18], 0
      %s955 = sshll.u32 [#allocation17], 4
      %s956 = int_to_ptr.vmem [resolvable:$true] %s955
      %s957 = sshll.u32 %s9, 4
      %s958 = int_to_ptr.hbm [resolvable:$true] %s957
      %963 = dma.vmem_to_hbm [thread:$0]  %s956, 2048, %s958, [#allocation18], 128, 128, 8
    $region73: #{tpu_custom_call.1} parent=1 // pred_fallthru
      _
    // Predicated region
    $region74: #{tpu_custom_call.1} parent=1 // pred_check
      _
    $region75: #{tpu_custom_call.1} parent=1 // pred_check_branch
      %965 = sbr.rel (0) target = $region77
    $region76: #{tpu_custom_call.1} parent=1 // pred_region
      %967 = dma.done [#allocation4], 1024
    $region77: #{tpu_custom_call.1} parent=1 // pred_fallthru
      _
    // Predicated region
    $region78: #{tpu_custom_call.1} parent=1 // pred_check
      _
    $region79: #{tpu_custom_call.1} parent=1 // pred_check_branch
      %969 = sbr.rel (0) target = $region81
    $region80: #{tpu_custom_call.1} parent=1 // pred_region
      %971 = dma.done [#allocation18], 2048
    $region81: #{tpu_custom_call.1} parent=1 // pred_fallthru
      _
    %972 = vsyncpa [#allocation3], 1
    %973 = vsyncpa [#allocation4], 1
    %974 = vsyncpa [#allocation18], 1
    %975 = vsyncpa [#allocation5], 1
    %976 = vsyncpa [#allocation8], 1
    %977 = vsyncpa [#allocation11], 1
    %978 = vsyncpa [#allocation14], 1

</llo_original>
